<compile_context>
chip_gen: v6e
topology: v6e:2x2x1
jax: 0.10.0
libtpu: 0.0.40
codegen_flags: <defaults>
</compile_context>

<pallas_src>
import functools

import jax
import jax.numpy as jnp
from jax.experimental import pallas as pl
from jax.experimental.pallas import tpu as pltpu


def _round_up(v, m):
    return (v + m - 1) // m * m


def _block_kernel(x_ref,
                  wq_ref, wk_ref, wv_ref, bq_ref, bk_ref, bv_ref,
                  wo_ref, bo_ref,
                  g1_ref, b1_ref, g2_ref, b2_ref,
                  wfc_ref, bfc_ref, wproj_ref, bproj_ref,
                  o_ref, *, num_heads: int, l_valid: int, eps: float = 1e-5):
    xb = x_ref[...]                               # (B_TILE, Lp, D)
    B, Lp, D = xb.shape
    Dh = D // num_heads
    M = B * Lp
    cdt = wq_ref.dtype                            # matmul operand dtype (bf16)
    x = xb.reshape(M, D)                          # flatten: big-M matmuls

    def layernorm(v, g, b):
        # fp16-safe LayerNorm subclass: compute in fp32.
        vf = v.astype(jnp.float32)
        mu = jnp.mean(vf, axis=-1, keepdims=True)
        var = jnp.mean(jnp.square(vf - mu), axis=-1, keepdims=True)
        return (vf - mu) * jax.lax.rsqrt(var + eps) * g + b   # fp32

    # ---- attention branch: x + out_proj(softmax(q k^T) v) -----------------
    xn = layernorm(x, g1_ref[0], b1_ref[0]).astype(cdt)
    # 1/sqrt(Dh) is folded into wq/bq in prepare_params().
    q = (jnp.dot(xn, wq_ref[...], preferred_element_type=jnp.float32)
         + bq_ref[0]).astype(cdt)
    k = (jnp.dot(xn, wk_ref[...], preferred_element_type=jnp.float32)
         + bk_ref[0]).astype(cdt)
    v = (jnp.dot(xn, wv_ref[...], preferred_element_type=jnp.float32)
         + bv_ref[0]).astype(cdt)
    q3 = q.reshape(B, Lp, D)
    k3 = k.reshape(B, Lp, D)
    v3 = v.reshape(B, Lp, D)

    if Lp > l_valid:                              # static: only if padded
        key_ids = jax.lax.broadcasted_iota(jnp.int32, (1, 1, Lp), 2)
        key_bias = jnp.where(key_ids < l_valid, 0.0, -1e30).astype(jnp.float32)
    else:
        key_bias = None

    heads = []
    for hi in range(num_heads):                   # small static unroll
        sl = slice(hi * Dh, (hi + 1) * Dh)
        qh, kh, vh = q3[:, :, sl], k3[:, :, sl], v3[:, :, sl]
        s = jnp.einsum('bqd,bkd->bqk', qh, kh,
                       preferred_element_type=jnp.float32)   # (B, Lp, Lp) f32
        if key_bias is not None:
            s = s + key_bias                      # mask padded keys
        # attn_mask is None in this module's __init__; additive mask omitted.
        s = s - jnp.max(s, axis=-1, keepdims=True)
        p = jnp.exp(s)
        p = p * pl.reciprocal(jnp.sum(p, axis=-1, keepdims=True), approx=True)
        heads.append(jnp.einsum('bqk,bkd->bqd', p.astype(cdt), vh,
                                preferred_element_type=jnp.float32).astype(cdt))
    ctx = jnp.concatenate(heads, axis=-1).reshape(M, D)
    attn = (jnp.dot(ctx, wo_ref[...], preferred_element_type=jnp.float32)
            + bo_ref[0])
    x = x + attn.astype(x.dtype)

    # ---- MLP branch: x + c_proj(QuickGELU(c_fc(LN2(x)))) ------------------
    xn2 = layernorm(x, g2_ref[0], b2_ref[0]).astype(cdt)
    hdn = (jnp.dot(xn2, wfc_ref[...], preferred_element_type=jnp.float32)
           + bfc_ref[0])                          # (M, 4D) f32
    hdn = hdn * jax.nn.sigmoid(1.702 * hdn)       # QuickGELU
    mlp = (jnp.dot(hdn.astype(cdt), wproj_ref[...],
                   preferred_element_type=jnp.float32) + bproj_ref[0])
    out = x + mlp.astype(x.dtype)
    o_ref[...] = out.reshape(B, Lp, D).astype(o_ref.dtype)


_WEIGHT_ORDER = ("wq", "wk", "wv", "bq", "bk", "bv", "wo", "bo",
                 "g1", "b1", "g2", "b2", "wfc", "bfc", "wproj", "bproj")


def prepare_params(raw, *, n_head, compute_dtype=jnp.bfloat16):
    """One-time weight prep: transpose to (in, out), split the QKV in-proj,
    fold the 1/sqrt(Dh) scale into the q weights/bias, cast matmul operands
    to the compute dtype (bf16); LayerNorm params & biases stay fp32."""
    D = raw["wo"].shape[0]
    scale = float((D // n_head) ** -0.5)
    f32 = jnp.float32
    wqkv = raw["wqkv"]                      # torch layout (3D, D) = (out, in)
    bqkv = raw["bqkv"].reshape(-1)          # (3D,)
    wq, wk, wv = wqkv[:D], wqkv[D:2 * D], wqkv[2 * D:]
    bq, bk, bv = bqkv[:D], bqkv[D:2 * D], bqkv[2 * D:]
    return {
        "wq": (wq.T * scale).astype(compute_dtype),    # (D, D)
        "wk": wk.T.astype(compute_dtype),
        "wv": wv.T.astype(compute_dtype),
        "bq": (bq * scale).reshape(1, D).astype(f32),
        "bk": bk.reshape(1, D).astype(f32),
        "bv": bv.reshape(1, D).astype(f32),
        "wo": raw["wo"].T.astype(compute_dtype),       # (D, D)
        "bo": raw["bo"].reshape(1, D).astype(f32),
        "g1": raw["g1"].reshape(1, D).astype(f32),
        "b1": raw["b1"].reshape(1, D).astype(f32),
        "g2": raw["g2"].reshape(1, D).astype(f32),
        "b2": raw["b2"].reshape(1, D).astype(f32),
        "wfc": raw["wfc"].T.astype(compute_dtype),     # (D, 4D)
        "bfc": raw["bfc"].reshape(1, 4 * D).astype(f32),
        "wproj": raw["wproj"].T.astype(compute_dtype),  # (4D, D)
        "bproj": raw["bproj"].reshape(1, D).astype(f32),
    }


def _run_block(x_lnd, params, *, n_head, b_tile=None):
    L, N, D = x_lnd.shape
    Lp = _round_up(L, 8)                           # sublane-align sequence
    x = jnp.transpose(x_lnd, (1, 0, 2))            # (N, L, D) batch-major
    if Lp != L:
        x = jnp.pad(x, ((0, 0), (0, Lp - L), (0, 0)))
    if b_tile is None:
        # Target >= 256 rows per projection matmul, capped by the batch size.
        b_tile = max(1, min(N, -(-256 // Lp)))
    Np = _round_up(N, b_tile)
    if Np != N:
        x = jnp.pad(x, ((0, Np - N), (0, 0), (0, 0)))
    grid = (Np // b_tile,)

    weights = [params[name] for name in _WEIGHT_ORDER]

    def full_spec(a):
        nd = a.ndim
        return pl.BlockSpec(a.shape, lambda b, _nd=nd: (0,) * _nd)

    # VMEM budget: weights are grid-invariant but the auto-pipeline may still
    # double-buffer them -> count twice, plus I/O blocks and activations.
    # TODO(synk): single-buffer weight BlockSpecs (pipeline_mode=pl.Buffered(1))
    # once that path is verified; bf16 weights already halve the footprint.
    w_bytes = sum(int(a.size) * a.dtype.itemsize for a in weights)
    io_bytes = 2 * 2 * b_tile * Lp * D * x.dtype.itemsize
    act_bytes = b_tile * Lp * (12 * D) * 4 + b_tile * Lp * Lp * 8
    est = 2 * w_bytes + io_bytes + act_bytes + (1 << 20)
    vmem_limit = int(min(112 * (1 << 20), max(24 * (1 << 20), 2 * est)))

    kernel = functools.partial(_block_kernel, num_heads=n_head, l_valid=L)
    out = pl.pallas_call(
        kernel,
        out_shape=jax.ShapeDtypeStruct((Np, Lp, D), x.dtype),
        grid=grid,
        in_specs=[pl.BlockSpec((b_tile, Lp, D), lambda b: (b, 0, 0))]
                 + [full_spec(a) for a in weights],
        out_specs=pl.BlockSpec((b_tile, Lp, D), lambda b: (b, 0, 0)),
        compiler_params=pltpu.CompilerParams(
            dimension_semantics=("parallel",),
            vmem_limit_bytes=vmem_limit),
    )(x, *weights)
    out = out[:N, :L, :]
    return jnp.transpose(out, (1, 0, 2))           # back to (L, N, D)


def residual_attention_block(inputs, params, *, n_head, nctx,
                             first_layer=False):
    """Mirrors ResidualAttentionBlock_learnable_token.forward (text branch).
    `counter` must stay a static Python int (it indexes a Python list)."""
    x, compound_prompts_deeper, counter = inputs   # x: (L, N, D) seq-first

    if not first_layer:
        if not counter > len(compound_prompts_deeper) - 1:
            prefix = x[:1, :, :]
            suffix = x[1 + nctx:, :, :]
            tc = compound_prompts_deeper[counter]                  # (nctx, D)
            tc = jnp.broadcast_to(tc[None, :, :],
                                  (x.shape[1], nctx, x.shape[2]))
            tc = jnp.transpose(tc, (1, 0, 2)).astype(x.dtype)      # (nctx,N,D)
            # TODO(synk): original casts textual_context to .half(); kept in
            # x.dtype here (fp32 in the demo).
            x = jnp.concatenate([prefix, tc, suffix], axis=0)
            counter = counter + 1

    x = _run_block(x, params, n_head=n_head)
    return [x, compound_prompts_deeper, counter]


def _init_raw_params(key, d_model):
    ks = jax.random.split(key, 8)
    s, D = 0.02, d_model
    return {
        "wqkv":  jax.random.normal(ks[0], (3 * D, D), jnp.float32) * s,
        "bqkv":  jax.random.normal(ks[1], (3 * D,), jnp.float32) * s,
        "wo":    jax.random.normal(ks[2], (D, D), jnp.float32) * s,
        "bo":    jax.random.normal(ks[3], (D,), jnp.float32) * s,
        "g1":    jnp.ones((D,), jnp.float32),
        "b1":    jnp.zeros((D,), jnp.float32),
        "g2":    jnp.ones((D,), jnp.float32),
        "b2":    jnp.zeros((D,), jnp.float32),
        "wfc":   jax.random.normal(ks[4], (4 * D, D), jnp.float32) * s,
        "bfc":   jax.random.normal(ks[5], (4 * D,), jnp.float32) * s,
        "wproj": jax.random.normal(ks[6], (D, 4 * D), jnp.float32) * s,
        "bproj": jax.random.normal(ks[7], (D,), jnp.float32) * s,
    }


if __name__ == "__main__":
    L, N, D, H, NCTX = 8, 2, 32, 4, 2            # seq, batch, d_model, heads
    key = jax.random.PRNGKey(0)
    k_params, k_x, k_p0, k_p1 = jax.random.split(key, 4)

    raw_params = _init_raw_params(k_params, D)
    params = prepare_params(raw_params, n_head=H)     # one-time weight prep

    x = jax.random.normal(k_x, (L, N, D), jnp.float32)
    compound_prompts_deeper = [
        jax.random.normal(k_p0, (NCTX, D), jnp.float32) * 0.02,
        jax.random.normal(k_p1, (NCTX, D), jnp.float32) * 0.02,
    ]
    counter = 0

    out_x, out_prompts, out_counter = residual_attention_block(
        [x, compound_prompts_deeper, counter], params,
        n_head=H, nctx=NCTX, first_layer=False)

    jax.block_until_ready(out_x)
    assert out_x.shape == (L, N, D)
    assert out_counter == 1
    assert bool(jnp.all(jnp.isfinite(out_x)))
    print("KERNEL_OK")
</pallas_src>

<mosaic_0001>
module attributes {stable_mosaic.version = 11 : i64} {
  func.func @_block_kernel(%arg0: i32, %arg1: memref<2x8x32xf32, #tpu.memory_space<vmem>>, %arg2: memref<32x32xbf16, #tpu.memory_space<vmem>>, %arg3: memref<32x32xbf16, #tpu.memory_space<vmem>>, %arg4: memref<32x32xbf16, #tpu.memory_space<vmem>>, %arg5: memref<1x32xf32, #tpu.memory_space<vmem>>, %arg6: memref<1x32xf32, #tpu.memory_space<vmem>>, %arg7: memref<1x32xf32, #tpu.memory_space<vmem>>, %arg8: memref<32x32xbf16, #tpu.memory_space<vmem>>, %arg9: memref<1x32xf32, #tpu.memory_space<vmem>>, %arg10: memref<1x32xf32, #tpu.memory_space<vmem>>, %arg11: memref<1x32xf32, #tpu.memory_space<vmem>>, %arg12: memref<1x32xf32, #tpu.memory_space<vmem>>, %arg13: memref<1x32xf32, #tpu.memory_space<vmem>>, %arg14: memref<32x128xbf16, #tpu.memory_space<vmem>>, %arg15: memref<1x128xf32, #tpu.memory_space<vmem>>, %arg16: memref<128x32xbf16, #tpu.memory_space<vmem>>, %arg17: memref<1x32xf32, #tpu.memory_space<vmem>>, %arg18: memref<2x8x32xf32, #tpu.memory_space<vmem>>) attributes {dimension_semantics = [#tpu.dimension_semantics<parallel>], iteration_bounds = array<i64: 1>, scalar_prefetch = 0 : i64, scratch_operands = 0 : i64, tpu.core_type = #tpu.core_type<tc>, window_params = [{transform_indices = @transform_0, window_bounds = array<i64: 2, 8, 32>}, {pipeline_mode = #tpu.pipeline_mode<synchronous>, transform_indices = @transform_1, window_bounds = array<i64: 32, 32>}, {pipeline_mode = #tpu.pipeline_mode<synchronous>, transform_indices = @transform_2, window_bounds = array<i64: 32, 32>}, {pipeline_mode = #tpu.pipeline_mode<synchronous>, transform_indices = @transform_3, window_bounds = array<i64: 32, 32>}, {pipeline_mode = #tpu.pipeline_mode<synchronous>, transform_indices = @transform_4, window_bounds = array<i64: 1, 32>}, {pipeline_mode = #tpu.pipeline_mode<synchronous>, transform_indices = @transform_5, window_bounds = array<i64: 1, 32>}, {pipeline_mode = #tpu.pipeline_mode<synchronous>, transform_indices = @transform_6, window_bounds = array<i64: 1, 32>}, {pipeline_mode = #tpu.pipeline_mode<synchronous>, transform_indices = @transform_7, window_bounds = array<i64: 32, 32>}, {pipeline_mode = #tpu.pipeline_mode<synchronous>, transform_indices = @transform_8, window_bounds = array<i64: 1, 32>}, {pipeline_mode = #tpu.pipeline_mode<synchronous>, transform_indices = @transform_9, window_bounds = array<i64: 1, 32>}, {pipeline_mode = #tpu.pipeline_mode<synchronous>, transform_indices = @transform_10, window_bounds = array<i64: 1, 32>}, {pipeline_mode = #tpu.pipeline_mode<synchronous>, transform_indices = @transform_11, window_bounds = array<i64: 1, 32>}, {pipeline_mode = #tpu.pipeline_mode<synchronous>, transform_indices = @transform_12, window_bounds = array<i64: 1, 32>}, {pipeline_mode = #tpu.pipeline_mode<synchronous>, transform_indices = @transform_13, window_bounds = array<i64: 32, 128>}, {pipeline_mode = #tpu.pipeline_mode<synchronous>, transform_indices = @transform_14, window_bounds = array<i64: 1, 128>}, {pipeline_mode = #tpu.pipeline_mode<synchronous>, transform_indices = @transform_15, window_bounds = array<i64: 128, 32>}, {pipeline_mode = #tpu.pipeline_mode<synchronous>, transform_indices = @transform_16, window_bounds = array<i64: 1, 32>}, {transform_indices = @transform_17, window_bounds = array<i64: 2, 8, 32>}]} {
    %c0 = arith.constant 0 : index
    %c0_0 = arith.constant 0 : index
    %c0_1 = arith.constant 0 : index
    %0 = vector.load %arg1[%c0, %c0_0, %c0_1] : memref<2x8x32xf32, #tpu.memory_space<vmem>>, vector<2x8x32xf32>
    %1 = vector.shape_cast %0 : vector<2x8x32xf32> to vector<16x32xf32>
    %c0_2 = arith.constant 0 : index
    %c0_3 = arith.constant 0 : index
    %2 = vector.load %arg10[%c0_2, %c0_3] : memref<1x32xf32, #tpu.memory_space<vmem>>, vector<1x32xf32>
    %3 = vector.shape_cast %2 : vector<1x32xf32> to vector<32xf32>
    %c0_4 = arith.constant 0 : index
    %c0_5 = arith.constant 0 : index
    %4 = vector.load %arg11[%c0_4, %c0_5] : memref<1x32xf32, #tpu.memory_space<vmem>>, vector<1x32xf32>
    %5 = vector.shape_cast %4 : vector<1x32xf32> to vector<32xf32>
    %cst = arith.constant dense<0.000000e+00> : vector<16xf32>
    %6 = vector.multi_reduction <add>, %1, %cst [1] : vector<16x32xf32> to vector<16xf32>
    %7 = vector.shape_cast %6 : vector<16xf32> to vector<16x1xf32>
    %cst_6 = arith.constant 3.200000e+01 : f32
    %8 = vector.broadcast %cst_6 : f32 to vector<16x1xf32>
    %9 = arith.divf %7, %8 : vector<16x1xf32>
    %10 = vector.broadcast %9 : vector<16x1xf32> to vector<16x32xf32>
    %11 = arith.subf %1, %10 : vector<16x32xf32>
    %12 = arith.mulf %11, %11 : vector<16x32xf32>
    %cst_7 = arith.constant dense<0.000000e+00> : vector<16xf32>
    %13 = vector.multi_reduction <add>, %12, %cst_7 [1] : vector<16x32xf32> to vector<16xf32>
    %14 = vector.shape_cast %13 : vector<16xf32> to vector<16x1xf32>
    %cst_8 = arith.constant 3.200000e+01 : f32
    %15 = vector.broadcast %cst_8 : f32 to vector<16x1xf32>
    %16 = arith.divf %14, %15 : vector<16x1xf32>
    %17 = vector.broadcast %9 : vector<16x1xf32> to vector<16x32xf32>
    %18 = arith.subf %1, %17 : vector<16x32xf32>
    %cst_9 = arith.constant 9.99999974E-6 : f32
    %19 = vector.broadcast %cst_9 : f32 to vector<16x1xf32>
    %20 = arith.addf %16, %19 : vector<16x1xf32>
    %21 = math.rsqrt %20 : vector<16x1xf32>
    %22 = vector.broadcast %21 : vector<16x1xf32> to vector<16x32xf32>
    %23 = arith.mulf %18, %22 : vector<16x32xf32>
    %24 = vector.shape_cast %3 : vector<32xf32> to vector<1x32xf32>
    %25 = vector.broadcast %24 : vector<1x32xf32> to vector<16x32xf32>
    %26 = arith.mulf %23, %25 : vector<16x32xf32>
    %27 = vector.shape_cast %5 : vector<32xf32> to vector<1x32xf32>
    %28 = vector.broadcast %27 : vector<1x32xf32> to vector<16x32xf32>
    %29 = arith.addf %26, %28 : vector<16x32xf32>
    %30 = arith.truncf %29 : vector<16x32xf32> to vector<16x32xbf16>
    %c0_10 = arith.constant 0 : index
    %c0_11 = arith.constant 0 : index
    %31 = vector.load %arg2[%c0_10, %c0_11] : memref<32x32xbf16, #tpu.memory_space<vmem>>, vector<32x32xbf16>
    %cst_12 = arith.constant dense<0.000000e+00> : vector<16x32xf32>
    %32 = tpu.matmul %30, %31, %cst_12 {dimension_numbers = #tpu.dot_dimension_numbers<[1], [0], [0], [1], [0, 0, 1, 1], [], []>} : vector<16x32xbf16>, vector<32x32xbf16>, vector<16x32xf32> -> vector<16x32xf32>
    %c0_13 = arith.constant 0 : index
    %c0_14 = arith.constant 0 : index
    %33 = vector.load %arg5[%c0_13, %c0_14] : memref<1x32xf32, #tpu.memory_space<vmem>>, vector<1x32xf32>
    %34 = vector.shape_cast %33 : vector<1x32xf32> to vector<32xf32>
    %35 = vector.shape_cast %34 : vector<32xf32> to vector<1x32xf32>
    %36 = vector.broadcast %35 : vector<1x32xf32> to vector<16x32xf32>
    %37 = arith.addf %32, %36 : vector<16x32xf32>
    %38 = arith.truncf %37 : vector<16x32xf32> to vector<16x32xbf16>
    %c0_15 = arith.constant 0 : index
    %c0_16 = arith.constant 0 : index
    %39 = vector.load %arg3[%c0_15, %c0_16] : memref<32x32xbf16, #tpu.memory_space<vmem>>, vector<32x32xbf16>
    %cst_17 = arith.constant dense<0.000000e+00> : vector<16x32xf32>
    %40 = tpu.matmul %30, %39, %cst_17 {dimension_numbers = #tpu.dot_dimension_numbers<[1], [0], [0], [1], [0, 0, 1, 1], [], []>} : vector<16x32xbf16>, vector<32x32xbf16>, vector<16x32xf32> -> vector<16x32xf32>
    %c0_18 = arith.constant 0 : index
    %c0_19 = arith.constant 0 : index
    %41 = vector.load %arg6[%c0_18, %c0_19] : memref<1x32xf32, #tpu.memory_space<vmem>>, vector<1x32xf32>
    %42 = vector.shape_cast %41 : vector<1x32xf32> to vector<32xf32>
    %43 = vector.shape_cast %42 : vector<32xf32> to vector<1x32xf32>
    %44 = vector.broadcast %43 : vector<1x32xf32> to vector<16x32xf32>
    %45 = arith.addf %40, %44 : vector<16x32xf32>
    %46 = arith.truncf %45 : vector<16x32xf32> to vector<16x32xbf16>
    %c0_20 = arith.constant 0 : index
    %c0_21 = arith.constant 0 : index
    %47 = vector.load %arg4[%c0_20, %c0_21] : memref<32x32xbf16, #tpu.memory_space<vmem>>, vector<32x32xbf16>
    %cst_22 = arith.constant dense<0.000000e+00> : vector<16x32xf32>
    %48 = tpu.matmul %30, %47, %cst_22 {dimension_numbers = #tpu.dot_dimension_numbers<[1], [0], [0], [1], [0, 0, 1, 1], [], []>} : vector<16x32xbf16>, vector<32x32xbf16>, vector<16x32xf32> -> vector<16x32xf32>
    %c0_23 = arith.constant 0 : index
    %c0_24 = arith.constant 0 : index
    %49 = vector.load %arg7[%c0_23, %c0_24] : memref<1x32xf32, #tpu.memory_space<vmem>>, vector<1x32xf32>
    %50 = vector.shape_cast %49 : vector<1x32xf32> to vector<32xf32>
    %51 = vector.shape_cast %50 : vector<32xf32> to vector<1x32xf32>
    %52 = vector.broadcast %51 : vector<1x32xf32> to vector<16x32xf32>
    %53 = arith.addf %48, %52 : vector<16x32xf32>
    %54 = arith.truncf %53 : vector<16x32xf32> to vector<16x32xbf16>
    %55 = vector.shape_cast %38 : vector<16x32xbf16> to vector<2x8x32xbf16>
    %56 = vector.shape_cast %46 : vector<16x32xbf16> to vector<2x8x32xbf16>
    %57 = vector.shape_cast %54 : vector<16x32xbf16> to vector<2x8x32xbf16>
    %58 = vector.extract_strided_slice %55 {offsets = [0, 0, 0], sizes = [2, 8, 8], strides = [1, 1, 1]} : vector<2x8x32xbf16> to vector<2x8x8xbf16>
    %59 = vector.extract_strided_slice %56 {offsets = [0, 0, 0], sizes = [2, 8, 8], strides = [1, 1, 1]} : vector<2x8x32xbf16> to vector<2x8x8xbf16>
    %60 = vector.extract_strided_slice %57 {offsets = [0, 0, 0], sizes = [2, 8, 8], strides = [1, 1, 1]} : vector<2x8x32xbf16> to vector<2x8x8xbf16>
    "tpu.trace_start"() <{level = 10 : i32, message = "bqd,bkd->bqk"}> : () -> ()
    %cst_25 = arith.constant dense<0.000000e+00> : vector<2x8x8xf32>
    %61 = tpu.matmul %58, %59, %cst_25 {dimension_numbers = #tpu.dot_dimension_numbers<[2], [2], [1], [1], [0, 0, 0, 1, 1, 1], [0], [0]>} : vector<2x8x8xbf16>, vector<2x8x8xbf16>, vector<2x8x8xf32> -> vector<2x8x8xf32>
    "tpu.trace_stop"() : () -> ()
    %cst_26 = arith.constant dense<0xFF800000> : vector<2x8xf32>
    %62 = vector.multi_reduction <maximumf>, %61, %cst_26 [2] : vector<2x8x8xf32> to vector<2x8xf32>
    %63 = vector.shape_cast %62 : vector<2x8xf32> to vector<2x8x1xf32>
    %64 = vector.broadcast %63 : vector<2x8x1xf32> to vector<2x8x8xf32>
    %65 = arith.subf %61, %64 : vector<2x8x8xf32>
    %66 = math.exp %65 : vector<2x8x8xf32>
    %cst_27 = arith.constant dense<0.000000e+00> : vector<2x8xf32>
    %67 = vector.multi_reduction <add>, %66, %cst_27 [2] : vector<2x8x8xf32> to vector<2x8xf32>
    %68 = vector.shape_cast %67 : vector<2x8xf32> to vector<2x8x1xf32>
    %69 = tpu.reciprocal %68 {approx = true} : vector<2x8x1xf32> -> vector<2x8x1xf32>
    %70 = vector.broadcast %69 : vector<2x8x1xf32> to vector<2x8x8xf32>
    %71 = arith.mulf %66, %70 : vector<2x8x8xf32>
    %72 = arith.truncf %71 : vector<2x8x8xf32> to vector<2x8x8xbf16>
    "tpu.trace_start"() <{level = 10 : i32, message = "bqk,bkd->bqd"}> : () -> ()
    %cst_28 = arith.constant dense<0.000000e+00> : vector<2x8x8xf32>
    %73 = tpu.matmul %72, %60, %cst_28 {dimension_numbers = #tpu.dot_dimension_numbers<[2], [1], [1], [2], [0, 0, 0, 1, 1, 2], [0], [0]>} : vector<2x8x8xbf16>, vector<2x8x8xbf16>, vector<2x8x8xf32> -> vector<2x8x8xf32>
    "tpu.trace_stop"() : () -> ()
    %74 = arith.truncf %73 : vector<2x8x8xf32> to vector<2x8x8xbf16>
    %75 = vector.extract_strided_slice %55 {offsets = [0, 0, 8], sizes = [2, 8, 8], strides = [1, 1, 1]} : vector<2x8x32xbf16> to vector<2x8x8xbf16>
    %76 = vector.extract_strided_slice %56 {offsets = [0, 0, 8], sizes = [2, 8, 8], strides = [1, 1, 1]} : vector<2x8x32xbf16> to vector<2x8x8xbf16>
    %77 = vector.extract_strided_slice %57 {offsets = [0, 0, 8], sizes = [2, 8, 8], strides = [1, 1, 1]} : vector<2x8x32xbf16> to vector<2x8x8xbf16>
    "tpu.trace_start"() <{level = 10 : i32, message = "bqd,bkd->bqk"}> : () -> ()
    %cst_29 = arith.constant dense<0.000000e+00> : vector<2x8x8xf32>
    %78 = tpu.matmul %75, %76, %cst_29 {dimension_numbers = #tpu.dot_dimension_numbers<[2], [2], [1], [1], [0, 0, 0, 1, 1, 1], [0], [0]>} : vector<2x8x8xbf16>, vector<2x8x8xbf16>, vector<2x8x8xf32> -> vector<2x8x8xf32>
    "tpu.trace_stop"() : () -> ()
    %cst_30 = arith.constant dense<0xFF800000> : vector<2x8xf32>
    %79 = vector.multi_reduction <maximumf>, %78, %cst_30 [2] : vector<2x8x8xf32> to vector<2x8xf32>
    %80 = vector.shape_cast %79 : vector<2x8xf32> to vector<2x8x1xf32>
    %81 = vector.broadcast %80 : vector<2x8x1xf32> to vector<2x8x8xf32>
    %82 = arith.subf %78, %81 : vector<2x8x8xf32>
    %83 = math.exp %82 : vector<2x8x8xf32>
    %cst_31 = arith.constant dense<0.000000e+00> : vector<2x8xf32>
    %84 = vector.multi_reduction <add>, %83, %cst_31 [2] : vector<2x8x8xf32> to vector<2x8xf32>
    %85 = vector.shape_cast %84 : vector<2x8xf32> to vector<2x8x1xf32>
    %86 = tpu.reciprocal %85 {approx = true} : vector<2x8x1xf32> -> vector<2x8x1xf32>
    %87 = vector.broadcast %86 : vector<2x8x1xf32> to vector<2x8x8xf32>
    %88 = arith.mulf %83, %87 : vector<2x8x8xf32>
    %89 = arith.truncf %88 : vector<2x8x8xf32> to vector<2x8x8xbf16>
    "tpu.trace_start"() <{level = 10 : i32, message = "bqk,bkd->bqd"}> : () -> ()
    %cst_32 = arith.constant dense<0.000000e+00> : vector<2x8x8xf32>
    %90 = tpu.matmul %89, %77, %cst_32 {dimension_numbers = #tpu.dot_dimension_numbers<[2], [1], [1], [2], [0, 0, 0, 1, 1, 2], [0], [0]>} : vector<2x8x8xbf16>, vector<2x8x8xbf16>, vector<2x8x8xf32> -> vector<2x8x8xf32>
    "tpu.trace_stop"() : () -> ()
    %91 = arith.truncf %90 : vector<2x8x8xf32> to vector<2x8x8xbf16>
    %92 = vector.extract_strided_slice %55 {offsets = [0, 0, 16], sizes = [2, 8, 8], strides = [1, 1, 1]} : vector<2x8x32xbf16> to vector<2x8x8xbf16>
    %93 = vector.extract_strided_slice %56 {offsets = [0, 0, 16], sizes = [2, 8, 8], strides = [1, 1, 1]} : vector<2x8x32xbf16> to vector<2x8x8xbf16>
    %94 = vector.extract_strided_slice %57 {offsets = [0, 0, 16], sizes = [2, 8, 8], strides = [1, 1, 1]} : vector<2x8x32xbf16> to vector<2x8x8xbf16>
    "tpu.trace_start"() <{level = 10 : i32, message = "bqd,bkd->bqk"}> : () -> ()
    %cst_33 = arith.constant dense<0.000000e+00> : vector<2x8x8xf32>
    %95 = tpu.matmul %92, %93, %cst_33 {dimension_numbers = #tpu.dot_dimension_numbers<[2], [2], [1], [1], [0, 0, 0, 1, 1, 1], [0], [0]>} : vector<2x8x8xbf16>, vector<2x8x8xbf16>, vector<2x8x8xf32> -> vector<2x8x8xf32>
    "tpu.trace_stop"() : () -> ()
    %cst_34 = arith.constant dense<0xFF800000> : vector<2x8xf32>
    %96 = vector.multi_reduction <maximumf>, %95, %cst_34 [2] : vector<2x8x8xf32> to vector<2x8xf32>
    %97 = vector.shape_cast %96 : vector<2x8xf32> to vector<2x8x1xf32>
    %98 = vector.broadcast %97 : vector<2x8x1xf32> to vector<2x8x8xf32>
    %99 = arith.subf %95, %98 : vector<2x8x8xf32>
    %100 = math.exp %99 : vector<2x8x8xf32>
    %cst_35 = arith.constant dense<0.000000e+00> : vector<2x8xf32>
    %101 = vector.multi_reduction <add>, %100, %cst_35 [2] : vector<2x8x8xf32> to vector<2x8xf32>
    %102 = vector.shape_cast %101 : vector<2x8xf32> to vector<2x8x1xf32>
    %103 = tpu.reciprocal %102 {approx = true} : vector<2x8x1xf32> -> vector<2x8x1xf32>
    %104 = vector.broadcast %103 : vector<2x8x1xf32> to vector<2x8x8xf32>
    %105 = arith.mulf %100, %104 : vector<2x8x8xf32>
    %106 = arith.truncf %105 : vector<2x8x8xf32> to vector<2x8x8xbf16>
    "tpu.trace_start"() <{level = 10 : i32, message = "bqk,bkd->bqd"}> : () -> ()
    %cst_36 = arith.constant dense<0.000000e+00> : vector<2x8x8xf32>
    %107 = tpu.matmul %106, %94, %cst_36 {dimension_numbers = #tpu.dot_dimension_numbers<[2], [1], [1], [2], [0, 0, 0, 1, 1, 2], [0], [0]>} : vector<2x8x8xbf16>, vector<2x8x8xbf16>, vector<2x8x8xf32> -> vector<2x8x8xf32>
    "tpu.trace_stop"() : () -> ()
    %108 = arith.truncf %107 : vector<2x8x8xf32> to vector<2x8x8xbf16>
    %109 = vector.extract_strided_slice %55 {offsets = [0, 0, 24], sizes = [2, 8, 8], strides = [1, 1, 1]} : vector<2x8x32xbf16> to vector<2x8x8xbf16>
    %110 = vector.extract_strided_slice %56 {offsets = [0, 0, 24], sizes = [2, 8, 8], strides = [1, 1, 1]} : vector<2x8x32xbf16> to vector<2x8x8xbf16>
    %111 = vector.extract_strided_slice %57 {offsets = [0, 0, 24], sizes = [2, 8, 8], strides = [1, 1, 1]} : vector<2x8x32xbf16> to vector<2x8x8xbf16>
    "tpu.trace_start"() <{level = 10 : i32, message = "bqd,bkd->bqk"}> : () -> ()
    %cst_37 = arith.constant dense<0.000000e+00> : vector<2x8x8xf32>
    %112 = tpu.matmul %109, %110, %cst_37 {dimension_numbers = #tpu.dot_dimension_numbers<[2], [2], [1], [1], [0, 0, 0, 1, 1, 1], [0], [0]>} : vector<2x8x8xbf16>, vector<2x8x8xbf16>, vector<2x8x8xf32> -> vector<2x8x8xf32>
    "tpu.trace_stop"() : () -> ()
    %cst_38 = arith.constant dense<0xFF800000> : vector<2x8xf32>
    %113 = vector.multi_reduction <maximumf>, %112, %cst_38 [2] : vector<2x8x8xf32> to vector<2x8xf32>
    %114 = vector.shape_cast %113 : vector<2x8xf32> to vector<2x8x1xf32>
    %115 = vector.broadcast %114 : vector<2x8x1xf32> to vector<2x8x8xf32>
    %116 = arith.subf %112, %115 : vector<2x8x8xf32>
    %117 = math.exp %116 : vector<2x8x8xf32>
    %cst_39 = arith.constant dense<0.000000e+00> : vector<2x8xf32>
    %118 = vector.multi_reduction <add>, %117, %cst_39 [2] : vector<2x8x8xf32> to vector<2x8xf32>
    %119 = vector.shape_cast %118 : vector<2x8xf32> to vector<2x8x1xf32>
    %120 = tpu.reciprocal %119 {approx = true} : vector<2x8x1xf32> -> vector<2x8x1xf32>
    %121 = vector.broadcast %120 : vector<2x8x1xf32> to vector<2x8x8xf32>
    %122 = arith.mulf %117, %121 : vector<2x8x8xf32>
    %123 = arith.truncf %122 : vector<2x8x8xf32> to vector<2x8x8xbf16>
    "tpu.trace_start"() <{level = 10 : i32, message = "bqk,bkd->bqd"}> : () -> ()
    %cst_40 = arith.constant dense<0.000000e+00> : vector<2x8x8xf32>
    %124 = tpu.matmul %123, %111, %cst_40 {dimension_numbers = #tpu.dot_dimension_numbers<[2], [1], [1], [2], [0, 0, 0, 1, 1, 2], [0], [0]>} : vector<2x8x8xbf16>, vector<2x8x8xbf16>, vector<2x8x8xf32> -> vector<2x8x8xf32>
    "tpu.trace_stop"() : () -> ()
    %125 = arith.truncf %124 : vector<2x8x8xf32> to vector<2x8x8xbf16>
    %126 = tpu.concatenate %74, %91, %108, %125 in 2 : vector<2x8x8xbf16>, vector<2x8x8xbf16>, vector<2x8x8xbf16>, vector<2x8x8xbf16> -> vector<2x8x32xbf16>
    %127 = vector.shape_cast %126 : vector<2x8x32xbf16> to vector<16x32xbf16>
    %c0_41 = arith.constant 0 : index
    %c0_42 = arith.constant 0 : index
    %128 = vector.load %arg8[%c0_41, %c0_42] : memref<32x32xbf16, #tpu.memory_space<vmem>>, vector<32x32xbf16>
    %cst_43 = arith.constant dense<0.000000e+00> : vector<16x32xf32>
    %129 = tpu.matmul %127, %128, %cst_43 {dimension_numbers = #tpu.dot_dimension_numbers<[1], [0], [0], [1], [0, 0, 1, 1], [], []>} : vector<16x32xbf16>, vector<32x32xbf16>, vector<16x32xf32> -> vector<16x32xf32>
    %c0_44 = arith.constant 0 : index
    %c0_45 = arith.constant 0 : index
    %130 = vector.load %arg9[%c0_44, %c0_45] : memref<1x32xf32, #tpu.memory_space<vmem>>, vector<1x32xf32>
    %131 = vector.shape_cast %130 : vector<1x32xf32> to vector<32xf32>
    %132 = vector.shape_cast %131 : vector<32xf32> to vector<1x32xf32>
    %133 = vector.broadcast %132 : vector<1x32xf32> to vector<16x32xf32>
    %134 = arith.addf %129, %133 : vector<16x32xf32>
    %135 = arith.addf %1, %134 : vector<16x32xf32>
    %c0_46 = arith.constant 0 : index
    %c0_47 = arith.constant 0 : index
    %136 = vector.load %arg12[%c0_46, %c0_47] : memref<1x32xf32, #tpu.memory_space<vmem>>, vector<1x32xf32>
    %137 = vector.shape_cast %136 : vector<1x32xf32> to vector<32xf32>
    %c0_48 = arith.constant 0 : index
    %c0_49 = arith.constant 0 : index
    %138 = vector.load %arg13[%c0_48, %c0_49] : memref<1x32xf32, #tpu.memory_space<vmem>>, vector<1x32xf32>
    %139 = vector.shape_cast %138 : vector<1x32xf32> to vector<32xf32>
    %cst_50 = arith.constant dense<0.000000e+00> : vector<16xf32>
    %140 = vector.multi_reduction <add>, %135, %cst_50 [1] : vector<16x32xf32> to vector<16xf32>
    %141 = vector.shape_cast %140 : vector<16xf32> to vector<16x1xf32>
    %cst_51 = arith.constant 3.200000e+01 : f32
    %142 = vector.broadcast %cst_51 : f32 to vector<16x1xf32>
    %143 = arith.divf %141, %142 : vector<16x1xf32>
    %144 = vector.broadcast %143 : vector<16x1xf32> to vector<16x32xf32>
    %145 = arith.subf %135, %144 : vector<16x32xf32>
    %146 = arith.mulf %145, %145 : vector<16x32xf32>
    %cst_52 = arith.constant dense<0.000000e+00> : vector<16xf32>
    %147 = vector.multi_reduction <add>, %146, %cst_52 [1] : vector<16x32xf32> to vector<16xf32>
    %148 = vector.shape_cast %147 : vector<16xf32> to vector<16x1xf32>
    %cst_53 = arith.constant 3.200000e+01 : f32
    %149 = vector.broadcast %cst_53 : f32 to vector<16x1xf32>
    %150 = arith.divf %148, %149 : vector<16x1xf32>
    %151 = vector.broadcast %143 : vector<16x1xf32> to vector<16x32xf32>
    %152 = arith.subf %135, %151 : vector<16x32xf32>
    %cst_54 = arith.constant 9.99999974E-6 : f32
    %153 = vector.broadcast %cst_54 : f32 to vector<16x1xf32>
    %154 = arith.addf %150, %153 : vector<16x1xf32>
    %155 = math.rsqrt %154 : vector<16x1xf32>
    %156 = vector.broadcast %155 : vector<16x1xf32> to vector<16x32xf32>
    %157 = arith.mulf %152, %156 : vector<16x32xf32>
    %158 = vector.shape_cast %137 : vector<32xf32> to vector<1x32xf32>
    %159 = vector.broadcast %158 : vector<1x32xf32> to vector<16x32xf32>
    %160 = arith.mulf %157, %159 : vector<16x32xf32>
    %161 = vector.shape_cast %139 : vector<32xf32> to vector<1x32xf32>
    %162 = vector.broadcast %161 : vector<1x32xf32> to vector<16x32xf32>
    %163 = arith.addf %160, %162 : vector<16x32xf32>
    %164 = arith.truncf %163 : vector<16x32xf32> to vector<16x32xbf16>
    %c0_55 = arith.constant 0 : index
    %c0_56 = arith.constant 0 : index
    %165 = vector.load %arg14[%c0_55, %c0_56] : memref<32x128xbf16, #tpu.memory_space<vmem>>, vector<32x128xbf16>
    %cst_57 = arith.constant dense<0.000000e+00> : vector<16x128xf32>
    %166 = tpu.matmul %164, %165, %cst_57 {dimension_numbers = #tpu.dot_dimension_numbers<[1], [0], [0], [1], [0, 0, 1, 1], [], []>} : vector<16x32xbf16>, vector<32x128xbf16>, vector<16x128xf32> -> vector<16x128xf32>
    %c0_58 = arith.constant 0 : index
    %c0_59 = arith.constant 0 : index
    %167 = vector.load %arg15[%c0_58, %c0_59] : memref<1x128xf32, #tpu.memory_space<vmem>>, vector<1x128xf32>
    %168 = vector.shape_cast %167 : vector<1x128xf32> to vector<128xf32>
    %169 = vector.shape_cast %168 : vector<128xf32> to vector<1x128xf32>
    %170 = vector.broadcast %169 : vector<1x128xf32> to vector<16x128xf32>
    %171 = arith.addf %166, %170 : vector<16x128xf32>
    %cst_60 = arith.constant 1.702000e+00 : f32
    %172 = vector.broadcast %cst_60 : f32 to vector<16x128xf32>
    %173 = arith.mulf %172, %171 : vector<16x128xf32>
    %174 = arith.negf %173 : vector<16x128xf32>
    %175 = math.exp %174 : vector<16x128xf32>
    %cst_61 = arith.constant 1.000000e+00 : f32
    %176 = vector.broadcast %cst_61 : f32 to vector<16x128xf32>
    %177 = arith.addf %176, %175 : vector<16x128xf32>
    %178 = arith.divf %176, %177 : vector<16x128xf32>
    %179 = arith.mulf %171, %178 : vector<16x128xf32>
    %180 = arith.truncf %179 : vector<16x128xf32> to vector<16x128xbf16>
    %c0_62 = arith.constant 0 : index
    %c0_63 = arith.constant 0 : index
    %181 = vector.load %arg16[%c0_62, %c0_63] : memref<128x32xbf16, #tpu.memory_space<vmem>>, vector<128x32xbf16>
    %cst_64 = arith.constant dense<0.000000e+00> : vector<16x32xf32>
    %182 = tpu.matmul %180, %181, %cst_64 {dimension_numbers = #tpu.dot_dimension_numbers<[1], [0], [0], [1], [0, 0, 1, 1], [], []>} : vector<16x128xbf16>, vector<128x32xbf16>, vector<16x32xf32> -> vector<16x32xf32>
    %c0_65 = arith.constant 0 : index
    %c0_66 = arith.constant 0 : index
    %183 = vector.load %arg17[%c0_65, %c0_66] : memref<1x32xf32, #tpu.memory_space<vmem>>, vector<1x32xf32>
    %184 = vector.shape_cast %183 : vector<1x32xf32> to vector<32xf32>
    %185 = vector.shape_cast %184 : vector<32xf32> to vector<1x32xf32>
    %186 = vector.broadcast %185 : vector<1x32xf32> to vector<16x32xf32>
    %187 = arith.addf %182, %186 : vector<16x32xf32>
    %188 = arith.addf %135, %187 : vector<16x32xf32>
    %189 = vector.shape_cast %188 : vector<16x32xf32> to vector<2x8x32xf32>
    %c0_67 = arith.constant 0 : index
    %c0_68 = arith.constant 0 : index
    %c0_69 = arith.constant 0 : index
    %190 = vector.load %arg18[%c0_67, %c0_68, %c0_69] : memref<2x8x32xf32, #tpu.memory_space<vmem>>, vector<2x8x32xf32>
    tpu.vector_store %arg18[%c0_67, %c0_68, %c0_69], %189 {strides = array<i32>} : memref<2x8x32xf32, #tpu.memory_space<vmem>>, vector<2x8x32xf32>,
    return
  }
  func.func @transform_0(%arg0: i32) -> (i32, i32, i32) {
    %c0_i32 = arith.constant 0 : i32
    %c0_i32_0 = arith.constant 0 : i32
    %c0_i32_1 = arith.constant 0 : i32
    return %arg0, %c0_i32, %c0_i32_0 : i32, i32, i32
  }
  func.func @transform_1(%arg0: i32) -> (i32, i32) {
    %c0_i32 = arith.constant 0 : i32
    %c0_i32_0 = arith.constant 0 : i32
    %c0_i32_1 = arith.constant 0 : i32
    return %c0_i32, %c0_i32_0 : i32, i32
  }
  func.func @transform_2(%arg0: i32) -> (i32, i32) {
    %c0_i32 = arith.constant 0 : i32
    %c0_i32_0 = arith.constant 0 : i32
    %c0_i32_1 = arith.constant 0 : i32
    return %c0_i32, %c0_i32_0 : i32, i32
  }
  func.func @transform_3(%arg0: i32) -> (i32, i32) {
    %c0_i32 = arith.constant 0 : i32
    %c0_i32_0 = arith.constant 0 : i32
    %c0_i32_1 = arith.constant 0 : i32
    return %c0_i32, %c0_i32_0 : i32, i32
  }
  func.func @transform_4(%arg0: i32) -> (i32, i32) {
    %c0_i32 = arith.constant 0 : i32
    %c0_i32_0 = arith.constant 0 : i32
    %c0_i32_1 = arith.constant 0 : i32
    return %c0_i32, %c0_i32_0 : i32, i32
  }
  func.func @transform_5(%arg0: i32) -> (i32, i32) {
    %c0_i32 = arith.constant 0 : i32
    %c0_i32_0 = arith.constant 0 : i32
    %c0_i32_1 = arith.constant 0 : i32
    return %c0_i32, %c0_i32_0 : i32, i32
  }
  func.func @transform_6(%arg0: i32) -> (i32, i32) {
    %c0_i32 = arith.constant 0 : i32
    %c0_i32_0 = arith.constant 0 : i32
    %c0_i32_1 = arith.constant 0 : i32
    return %c0_i32, %c0_i32_0 : i32, i32
  }
  func.func @transform_7(%arg0: i32) -> (i32, i32) {
    %c0_i32 = arith.constant 0 : i32
    %c0_i32_0 = arith.constant 0 : i32
    %c0_i32_1 = arith.constant 0 : i32
    return %c0_i32, %c0_i32_0 : i32, i32
  }
  func.func @transform_8(%arg0: i32) -> (i32, i32) {
    %c0_i32 = arith.constant 0 : i32
    %c0_i32_0 = arith.constant 0 : i32
    %c0_i32_1 = arith.constant 0 : i32
    return %c0_i32, %c0_i32_0 : i32, i32
  }
  func.func @transform_9(%arg0: i32) -> (i32, i32) {
    %c0_i32 = arith.constant 0 : i32
    %c0_i32_0 = arith.constant 0 : i32
    %c0_i32_1 = arith.constant 0 : i32
    return %c0_i32, %c0_i32_0 : i32, i32
  }
  func.func @transform_10(%arg0: i32) -> (i32, i32) {
    %c0_i32 = arith.constant 0 : i32
    %c0_i32_0 = arith.constant 0 : i32
    %c0_i32_1 = arith.constant 0 : i32
    return %c0_i32, %c0_i32_0 : i32, i32
  }
  func.func @transform_11(%arg0: i32) -> (i32, i32) {
    %c0_i32 = arith.constant 0 : i32
    %c0_i32_0 = arith.constant 0 : i32
    %c0_i32_1 = arith.constant 0 : i32
    return %c0_i32, %c0_i32_0 : i32, i32
  }
  func.func @transform_12(%arg0: i32) -> (i32, i32) {
    %c0_i32 = arith.constant 0 : i32
    %c0_i32_0 = arith.constant 0 : i32
    %c0_i32_1 = arith.constant 0 : i32
    return %c0_i32, %c0_i32_0 : i32, i32
  }
  func.func @transform_13(%arg0: i32) -> (i32, i32) {
    %c0_i32 = arith.constant 0 : i32
    %c0_i32_0 = arith.constant 0 : i32
    %c0_i32_1 = arith.constant 0 : i32
    return %c0_i32, %c0_i32_0 : i32, i32
  }
  func.func @transform_14(%arg0: i32) -> (i32, i32) {
    %c0_i32 = arith.constant 0 : i32
    %c0_i32_0 = arith.constant 0 : i32
    %c0_i32_1 = arith.constant 0 : i32
    return %c0_i32, %c0_i32_0 : i32, i32
  }
  func.func @transform_15(%arg0: i32) -> (i32, i32) {
    %c0_i32 = arith.constant 0 : i32
    %c0_i32_0 = arith.constant 0 : i32
    %c0_i32_1 = arith.constant 0 : i32
    return %c0_i32, %c0_i32_0 : i32, i32
  }
  func.func @transform_16(%arg0: i32) -> (i32, i32) {
    %c0_i32 = arith.constant 0 : i32
    %c0_i32_0 = arith.constant 0 : i32
    %c0_i32_1 = arith.constant 0 : i32
    return %c0_i32, %c0_i32_0 : i32, i32
  }
  func.func @transform_17(%arg0: i32) -> (i32, i32, i32) {
    %c0_i32 = arith.constant 0 : i32
    %c0_i32_0 = arith.constant 0 : i32
    %c0_i32_1 = arith.constant 0 : i32
    return %arg0, %c0_i32, %c0_i32_0 : i32, i32, i32
  }
}

</mosaic_0001>

<llo_original>
// kernel: tpu_custom_call.1
$region0: #{tpu_custom_call.1}
  #allocation0 [shape = 'u32[]', space=smem, size = 0x4, offset = 0x4, fixed_abs, tag = 'smem constant byte address 0x4 - core index']
  #allocation1 [shape = 'u32[144,128]{1,0:T(1,128)}', space=vmem, size = 0x12000, scoped, tag = 'internal scratch']
  %s0 = inlined_call_operand.vmem [shape: f32[2,8,32], index: 0, kind: input, shape index: {}]
  %s1 = inlined_call_operand.vmem [shape: bf16[32,32], index: 1, kind: input, shape index: {}]
  %s2 = inlined_call_operand.vmem [shape: bf16[32,32], index: 2, kind: input, shape index: {}]
  %s3 = inlined_call_operand.vmem [shape: bf16[32,32], index: 3, kind: input, shape index: {}]
  %s4 = inlined_call_operand.vmem [shape: f32[1,32], index: 4, kind: input, shape index: {}]
  %s5 = inlined_call_operand.vmem [shape: f32[1,32], index: 5, kind: input, shape index: {}]
  %s6 = inlined_call_operand.vmem [shape: f32[1,32], index: 6, kind: input, shape index: {}]
  %s7 = inlined_call_operand.vmem [shape: bf16[32,32], index: 7, kind: input, shape index: {}]
  %s8 = inlined_call_operand.vmem [shape: f32[1,32], index: 8, kind: input, shape index: {}]
  %s9 = inlined_call_operand.vmem [shape: f32[1,32], index: 9, kind: input, shape index: {}]
  %s10 = inlined_call_operand.vmem [shape: f32[1,32], index: 10, kind: input, shape index: {}]
  %s11 = inlined_call_operand.vmem [shape: f32[1,32], index: 11, kind: input, shape index: {}]
  %s12 = inlined_call_operand.vmem [shape: f32[1,32], index: 12, kind: input, shape index: {}]
  %s13 = inlined_call_operand.hbm [shape: bf16[32,128], index: 13, kind: input, shape index: {}]
  %s14 = inlined_call_operand.vmem [shape: f32[1,128], index: 14, kind: input, shape index: {}]
  %s15 = inlined_call_operand.vmem [shape: bf16[128,32], index: 15, kind: input, shape index: {}]
  %s16 = inlined_call_operand.vmem [shape: f32[1,32], index: 16, kind: input, shape index: {}]
  %s17 = inlined_call_operand.hbm [shape: f32[2,8,32], index: 17, kind: output, shape index: {}]
  %s18 = sld [smem:[#allocation0]]
  $region82: #{tpu_custom_call.1} parent=0
    _
  %s20 = ssub.s32 1, %s18
  %s21 = scalar_select 0, %s20, %s18
  $region1: #{tpu_custom_call.1} parent=0
    #allocation2 [shape = 'u8[8192]{0}', space=vmem, size = 0x2000, scoped, tag = 'input window, operand 13, single buffered']
    #allocation3 [shape = 's32[1]{0}', space=sflag, size = 0x4, scoped, tag = 'scoped memory for tpu_custom_call.1']
    #allocation4 [shape = 's32[1]{0}', space=sflag, size = 0x4, scoped, tag = 'scoped memory for tpu_custom_call.1']
    #allocation5 [shape = 'u8[8192]{0}', space=vmem, size = 0x2000, scoped, tag = 'output window, operand 0, single buffered']
    %22 = vsyncpa [#allocation3], 0
    %23 = vsyncpa [#allocation4], 0
    // Predicated region
    $region2: #{tpu_custom_call.1} parent=1 // pred_check
      _
    $region3: #{tpu_custom_call.1} parent=1 // pred_check_branch
      %25 = sbr.rel (0) target = $region5
    $region4: #{tpu_custom_call.1} parent=1 // pred_region
      _
    $region5: #{tpu_custom_call.1} parent=1 // pred_fallthru
      _
    // Predicated region
    $region6: #{tpu_custom_call.1} parent=1 // pred_check
      _
    $region7: #{tpu_custom_call.1} parent=1 // pred_check_branch
      %27 = sbr.rel (0) target = $region9
    $region8: #{tpu_custom_call.1} parent=1 // pred_region
      _
    $region9: #{tpu_custom_call.1} parent=1 // pred_fallthru
      _
    // Predicated region
    $region10: #{tpu_custom_call.1} parent=1 // pred_check
      _
    $region11: #{tpu_custom_call.1} parent=1 // pred_check_branch
      %29 = sbr.rel (0) target = $region13
    $region12: #{tpu_custom_call.1} parent=1 // pred_region
      _
    $region13: #{tpu_custom_call.1} parent=1 // pred_fallthru
      _
    // Predicated region
    $region14: #{tpu_custom_call.1} parent=1 // pred_check
      _
    $region15: #{tpu_custom_call.1} parent=1 // pred_check_branch
      %31 = sbr.rel (0) target = $region17
    $region16: #{tpu_custom_call.1} parent=1 // pred_region
      _
    $region17: #{tpu_custom_call.1} parent=1 // pred_fallthru
      _
    // Predicated region
    $region18: #{tpu_custom_call.1} parent=1 // pred_check
      _
    $region19: #{tpu_custom_call.1} parent=1 // pred_check_branch
      %33 = sbr.rel (0) target = $region21
    $region20: #{tpu_custom_call.1} parent=1 // pred_region
      _
    $region21: #{tpu_custom_call.1} parent=1 // pred_fallthru
      _
    // Predicated region
    $region22: #{tpu_custom_call.1} parent=1 // pred_check
      _
    $region23: #{tpu_custom_call.1} parent=1 // pred_check_branch
      %35 = sbr.rel (0) target = $region25
    $region24: #{tpu_custom_call.1} parent=1 // pred_region
      _
    $region25: #{tpu_custom_call.1} parent=1 // pred_fallthru
      _
    // Predicated region
    $region26: #{tpu_custom_call.1} parent=1 // pred_check
      _
    $region27: #{tpu_custom_call.1} parent=1 // pred_check_branch
      %37 = sbr.rel (0) target = $region29
    $region28: #{tpu_custom_call.1} parent=1 // pred_region
      _
    $region29: #{tpu_custom_call.1} parent=1 // pred_fallthru
      _
    // Predicated region
    $region30: #{tpu_custom_call.1} parent=1 // pred_check
      _
    $region31: #{tpu_custom_call.1} parent=1 // pred_check_branch
      %39 = sbr.rel (0) target = $region33
    $region32: #{tpu_custom_call.1} parent=1 // pred_region
      _
    $region33: #{tpu_custom_call.1} parent=1 // pred_fallthru
      _
    // Predicated region
    $region34: #{tpu_custom_call.1} parent=1 // pred_check
      _
    $region35: #{tpu_custom_call.1} parent=1 // pred_check_branch
      %41 = sbr.rel (0) target = $region37
    $region36: #{tpu_custom_call.1} parent=1 // pred_region
      _
    $region37: #{tpu_custom_call.1} parent=1 // pred_fallthru
      _
    // Predicated region
    $region38: #{tpu_custom_call.1} parent=1 // pred_check
      _
    $region39: #{tpu_custom_call.1} parent=1 // pred_check_branch
      %43 = sbr.rel (0) target = $region41
    $region40: #{tpu_custom_call.1} parent=1 // pred_region
      _
    $region41: #{tpu_custom_call.1} parent=1 // pred_fallthru
      _
    // Predicated region
    $region42: #{tpu_custom_call.1} parent=1 // pred_check
      _
    $region43: #{tpu_custom_call.1} parent=1 // pred_check_branch
      %45 = sbr.rel (0) target = $region45
    $region44: #{tpu_custom_call.1} parent=1 // pred_region
      _
    $region45: #{tpu_custom_call.1} parent=1 // pred_fallthru
      _
    // Predicated region
    $region46: #{tpu_custom_call.1} parent=1 // pred_check
      _
    $region47: #{tpu_custom_call.1} parent=1 // pred_check_branch
      %47 = sbr.rel (0) target = $region49
    $region48: #{tpu_custom_call.1} parent=1 // pred_region
      _
    $region49: #{tpu_custom_call.1} parent=1 // pred_fallthru
      _
    // Predicated region
    $region50: #{tpu_custom_call.1} parent=1 // pred_check
      _
    $region51: #{tpu_custom_call.1} parent=1 // pred_check_branch
      %49 = sbr.rel (0) target = $region53
    $region52: #{tpu_custom_call.1} parent=1 // pred_region
      _
    $region53: #{tpu_custom_call.1} parent=1 // pred_fallthru
      _
    // Predicated region
    $region54: #{tpu_custom_call.1} parent=1 // pred_check
      _
    $region55: #{tpu_custom_call.1} parent=1 // pred_check_branch
      %51 = sbr.rel (0) target = $region57
    $region56: #{tpu_custom_call.1} parent=1 // pred_region
      %s53 = ssub.s32 256, 256
      %54 = vsyncadd [#allocation3], %s53
      %s55 = sshll.u32 [#allocation2], 4
      %s56 = int_to_ptr.vmem [resolvable:$true] %s55
      %61 = dma.hbm_to_vmem [thread:$0]  %s13, 256, %s56, [#allocation3], 64, 64, 4
    $region57: #{tpu_custom_call.1} parent=1 // pred_fallthru
      _
    // Predicated region
    $region58: #{tpu_custom_call.1} parent=1 // pred_check
      _
    $region59: #{tpu_custom_call.1} parent=1 // pred_check_branch
      %63 = sbr.rel (0) target = $region61
    $region60: #{tpu_custom_call.1} parent=1 // pred_region
      _
    $region61: #{tpu_custom_call.1} parent=1 // pred_fallthru
      _
    // Predicated region
    $region62: #{tpu_custom_call.1} parent=1 // pred_check
      _
    $region63: #{tpu_custom_call.1} parent=1 // pred_check_branch
      %65 = sbr.rel (0) target = $region65
    $region64: #{tpu_custom_call.1} parent=1 // pred_region
      _
    $region65: #{tpu_custom_call.1} parent=1 // pred_fallthru
      _
    // Predicated region
    $region66: #{tpu_custom_call.1} parent=1 // pred_check
      _
    $region67: #{tpu_custom_call.1} parent=1 // pred_check_branch
      %67 = sbr.rel (0) target = $region69
    $region68: #{tpu_custom_call.1} parent=1 // pred_region
      _
    $region69: #{tpu_custom_call.1} parent=1 // pred_fallthru
      _
    // Predicated region
    $region70: #{tpu_custom_call.1} parent=1 // pred_check
      _
    $region71: #{tpu_custom_call.1} parent=1 // pred_check_branch
      %69 = sbr.rel (0) target = $region73
    $region72: #{tpu_custom_call.1} parent=1 // pred_region
      %70 = dma.done [#allocation3], 256
    $region73: #{tpu_custom_call.1} parent=1 // pred_fallthru
      _
    %v72 = vld [vmem:[%s0] sm:$0xff]
    %v73 = vld [vmem:[%s0 + $0x8] sm:$0xff]
    %v74 = vld [vmem:[%s9] sm:$0x1]
    %v75 = vld [vmem:[%s10] sm:$0x1]
    %vm76 = vcmask 261120
    %v77 = vsel %vm76, %v72, 0.0
    %78 = vadd.xlane.f32.xlu0 %v77
    %v79 = vpop.xlane.xlu0 %78
    %v80 = vsel %vm76, %v73, 0.0
    %81 = vadd.xlane.f32.xlu0 %v80
    %v82 = vpop.xlane.xlu0 %81
    %v83 = vrcp.pop 32.0
    %v84 = vmul.f32 %v79, %v83
    %v85 = vmul.f32 %v82, %v83
    %v86 = vsub.f32 %v72, %v84
    %v87 = vsub.f32 %v73, %v85
    %v88 = vmul.f32 %v86, %v86
    %v89 = vmul.f32 %v87, %v87
    %v90 = vsel %vm76, %v88, 0.0
    %91 = vadd.xlane.f32.xlu0 %v90
    %v92 = vpop.xlane.xlu0 %91
    %v93 = vsel %vm76, %v89, 0.0
    %94 = vadd.xlane.f32.xlu0 %v93
    %v95 = vpop.xlane.xlu0 %94
    %v96 = vmul.f32 %v92, %v83
    %v97 = vmul.f32 %v95, %v83
    %v98 = vadd.f32 %v96, 1e-05
    %v99 = vadd.f32 %v97, 1e-05
    %v100 = vrsqrt.pop %v98
    %v101 = vrsqrt.pop %v99
    %v102 = vmul.f32 %v86, %v100
    %v103 = vmul.f32 %v87, %v101
    %v105 = vlaneseq
    %v106 = vshrl.u32 %v105, 7
    %v107 = vsub.s32 0, %v106
    %v108 = vrot.slane %v74, %v107
    %v110 = vmul.f32 %v102, %v108
    %v111 = vmul.f32 %v103, %v108
    %v113 = vlaneseq
    %v114 = vshrl.u32 %v113, 7
    %v115 = vsub.s32 0, %v114
    %v116 = vrot.slane %v75, %v115
    %v118 = vadd.f32 %v110, %v116
    %v119 = vadd.f32 %v111, %v116
    %v120 = vpack.c.bf16 %v119, %v118
    %v121 = vld [vmem:[%s1] sm:$0xf]
    %v122 = vld [vmem:[%s1 + $0x4] sm:$0xf]
    %v123 = vld [vmem:[%s1 + $0x8] sm:$0xf]
    %v124 = vld [vmem:[%s1 + $0xc] sm:$0xf]
    %v125 = vld [vmem:[%s4] sm:$0x1]
    %v127 = vlaneseq
    %v128 = vshrl.u32 %v127, 7
    %v129 = vsub.s32 0, %v128
    %v130 = vrot.slane %v125, %v129
    %v136 = vunpack.c.l.b16 %v121
    %v137 = vunpack.c.l.b16 %v122
    %v138 = vunpack.c.l.b16 %v123
    %v139 = vunpack.c.l.b16 %v124
    %v140 = vpack.c.b16 %v137, %v136
    %v141 = vpack.c.b16 %v139, %v138
    %v145 = vsel %vm76, %v120, 0
    %147 = vmatprep.subr.bf16.mxu0 0
    %148 = vmatpush1.bf16.msra.mxu0 0
    %149 = vmatprep.subr.bf16.mxu0 0
    %150 = vmatpush1.bf16.msra.mxu0 0
    %151 = vmatprep.subr.bf16.mxu0 0
    %152 = vmatpush1.bf16.msra.mxu0 0
    %153 = vmatprep.subr.bf16.mxu0 0
    %154 = vmatpush1.bf16.msra.mxu0 0
    %155 = vmatprep.subr.bf16.mxu0 0
    %156 = vmatpush1.bf16.msra.mxu0 0
    %157 = vmatprep.subr.bf16.mxu0 0
    %158 = vmatpush1.bf16.msra.mxu0 0
    %159 = vmatprep.subr.bf16.mxu0 0
    %160 = vmatpush1.bf16.msra.mxu0 %v141
    %161 = vmatprep.subr.bf16.mxu0 0
    %162 = vmatpush1.bf16.msra.mxu0 %v140
    %163 = vmatprep.subr.bf16.mxu0 0
    %164 = vmatpush2.bf16.msra.mxu0 0
    %165 = vmatprep.subr.bf16.mxu0 0
    %166 = vmatpush2.bf16.msra.mxu0 0
    %167 = vmatprep.subr.bf16.mxu0 0
    %168 = vmatpush2.bf16.msra.mxu0 0
    %169 = vmatprep.subr.bf16.mxu0 0
    %170 = vmatpush2.bf16.msra.mxu0 0
    %171 = vmatprep.subr.bf16.mxu0 0
    %172 = vmatpush2.bf16.msra.mxu0 0
    %173 = vmatprep.subr.bf16.mxu0 0
    %174 = vmatpush2.bf16.msra.mxu0 0
    %175 = vmatprep.subr.bf16.mxu0 0
    %176 = vmatpush2.bf16.msra.mxu0 0
    %177 = vmatprep.subr.bf16.mxu0 0
    %178 = vmatpush2.bf16.msra.mxu0 0
    %179 = vmatprep.mubr.bf16.mxu0 0
    %180 = vmatmul.mubr.bf16.gmra.mxu0 %v145
    %v181 = vpop.f32.mrf.mxu0
    %v182 = vadd.f32 %v130, %v181
    %v183 = vpop.f32.mrf.mxu0
    %v184 = vpop.f32.mrf.mxu0
    %v185 = vadd.f32 %v130, %v184
    %v186 = vpop.f32.mrf.mxu0
    %187 = vdwg.mxu0
    %v188 = vpack.c.bf16 %v185, %v182
    %v189 = vld [vmem:[%s2] sm:$0xf]
    %v190 = vld [vmem:[%s2 + $0x4] sm:$0xf]
    %v191 = vld [vmem:[%s2 + $0x8] sm:$0xf]
    %v192 = vld [vmem:[%s2 + $0xc] sm:$0xf]
    %v193 = vld [vmem:[%s5] sm:$0x1]
    %v195 = vlaneseq
    %v196 = vshrl.u32 %v195, 7
    %v197 = vsub.s32 0, %v196
    %v198 = vrot.slane %v193, %v197
    %v204 = vunpack.c.l.b16 %v189
    %v205 = vunpack.c.l.b16 %v190
    %v206 = vunpack.c.l.b16 %v191
    %v207 = vunpack.c.l.b16 %v192
    %v208 = vpack.c.b16 %v205, %v204
    %v209 = vpack.c.b16 %v207, %v206
    %212 = vmatprep.subr.bf16.mxu0 0
    %213 = vmatpush1.bf16.msra.mxu0 0
    %214 = vmatprep.subr.bf16.mxu0 0
    %215 = vmatpush1.bf16.msra.mxu0 0
    %216 = vmatprep.subr.bf16.mxu0 0
    %217 = vmatpush1.bf16.msra.mxu0 0
    %218 = vmatprep.subr.bf16.mxu0 0
    %219 = vmatpush1.bf16.msra.mxu0 0
    %220 = vmatprep.subr.bf16.mxu0 0
    %221 = vmatpush1.bf16.msra.mxu0 0
    %222 = vmatprep.subr.bf16.mxu0 0
    %223 = vmatpush1.bf16.msra.mxu0 0
    %224 = vmatprep.subr.bf16.mxu0 0
    %225 = vmatpush1.bf16.msra.mxu0 %v209
    %226 = vmatprep.subr.bf16.mxu0 0
    %227 = vmatpush1.bf16.msra.mxu0 %v208
    %228 = vmatprep.subr.bf16.mxu0 0
    %229 = vmatpush2.bf16.msra.mxu0 0
    %230 = vmatprep.subr.bf16.mxu0 0
    %231 = vmatpush2.bf16.msra.mxu0 0
    %232 = vmatprep.subr.bf16.mxu0 0
    %233 = vmatpush2.bf16.msra.mxu0 0
    %234 = vmatprep.subr.bf16.mxu0 0
    %235 = vmatpush2.bf16.msra.mxu0 0
    %236 = vmatprep.subr.bf16.mxu0 0
    %237 = vmatpush2.bf16.msra.mxu0 0
    %238 = vmatprep.subr.bf16.mxu0 0
    %239 = vmatpush2.bf16.msra.mxu0 0
    %240 = vmatprep.subr.bf16.mxu0 0
    %241 = vmatpush2.bf16.msra.mxu0 0
    %242 = vmatprep.subr.bf16.mxu0 0
    %243 = vmatpush2.bf16.msra.mxu0 0
    %244 = vmatprep.mubr.bf16.mxu0 0
    %245 = vmatmul.mubr.bf16.gmra.mxu0 %v145
    %v246 = vpop.f32.mrf.mxu0
    %v247 = vadd.f32 %v198, %v246
    %v248 = vpop.f32.mrf.mxu0
    %v249 = vpop.f32.mrf.mxu0
    %v250 = vadd.f32 %v198, %v249
    %v251 = vpop.f32.mrf.mxu0
    %252 = vdwg.mxu0
    %v253 = vpack.c.bf16 %v250, %v247
    %v254 = vld [vmem:[%s3] sm:$0xf]
    %v255 = vld [vmem:[%s3 + $0x4] sm:$0xf]
    %v256 = vld [vmem:[%s3 + $0x8] sm:$0xf]
    %v257 = vld [vmem:[%s3 + $0xc] sm:$0xf]
    %v258 = vld [vmem:[%s6] sm:$0x1]
    %v260 = vlaneseq
    %v261 = vshrl.u32 %v260, 7
    %v262 = vsub.s32 0, %v261
    %v263 = vrot.slane %v258, %v262
    %v269 = vunpack.c.l.b16 %v254
    %v270 = vunpack.c.l.b16 %v255
    %v271 = vunpack.c.l.b16 %v256
    %v272 = vunpack.c.l.b16 %v257
    %v273 = vpack.c.b16 %v270, %v269
    %v274 = vpack.c.b16 %v272, %v271
    %277 = vmatprep.subr.bf16.mxu0 0
    %278 = vmatpush1.bf16.msra.mxu0 0
    %279 = vmatprep.subr.bf16.mxu0 0
    %280 = vmatpush1.bf16.msra.mxu0 0
    %281 = vmatprep.subr.bf16.mxu0 0
    %282 = vmatpush1.bf16.msra.mxu0 0
    %283 = vmatprep.subr.bf16.mxu0 0
    %284 = vmatpush1.bf16.msra.mxu0 0
    %285 = vmatprep.subr.bf16.mxu0 0
    %286 = vmatpush1.bf16.msra.mxu0 0
    %287 = vmatprep.subr.bf16.mxu0 0
    %288 = vmatpush1.bf16.msra.mxu0 0
    %289 = vmatprep.subr.bf16.mxu0 0
    %290 = vmatpush1.bf16.msra.mxu0 %v274
    %291 = vmatprep.subr.bf16.mxu0 0
    %292 = vmatpush1.bf16.msra.mxu0 %v273
    %293 = vmatprep.subr.bf16.mxu0 0
    %294 = vmatpush2.bf16.msra.mxu0 0
    %295 = vmatprep.subr.bf16.mxu0 0
    %296 = vmatpush2.bf16.msra.mxu0 0
    %297 = vmatprep.subr.bf16.mxu0 0
    %298 = vmatpush2.bf16.msra.mxu0 0
    %299 = vmatprep.subr.bf16.mxu0 0
    %300 = vmatpush2.bf16.msra.mxu0 0
    %301 = vmatprep.subr.bf16.mxu0 0
    %302 = vmatpush2.bf16.msra.mxu0 0
    %303 = vmatprep.subr.bf16.mxu0 0
    %304 = vmatpush2.bf16.msra.mxu0 0
    %305 = vmatprep.subr.bf16.mxu0 0
    %306 = vmatpush2.bf16.msra.mxu0 0
    %307 = vmatprep.subr.bf16.mxu0 0
    %308 = vmatpush2.bf16.msra.mxu0 0
    %309 = vmatprep.mubr.bf16.mxu0 0
    %310 = vmatmul.mubr.bf16.gmra.mxu0 %v145
    %v311 = vpop.f32.mrf.mxu0
    %v312 = vadd.f32 %v263, %v311
    %v313 = vpop.f32.mrf.mxu0
    %v314 = vpop.f32.mrf.mxu0
    %v315 = vadd.f32 %v263, %v314
    %v316 = vpop.f32.mrf.mxu0
    %317 = vdwg.mxu0
    %v318 = vpack.c.bf16 %v315, %v312
    %v320 = vunpack.c.l.b16 %v188
    %v321 = vunpack.c.h.b16 %v188
    %v322 = vpack.c.b16 %v320, %v320
    %v323 = vpack.c.b16 %v321, %v321
    %v325 = vunpack.c.l.b16 %v253
    %v326 = vunpack.c.h.b16 %v253
    %v327 = vpack.c.b16 %v325, %v325
    %v328 = vpack.c.b16 %v326, %v326
    %v330 = vunpack.c.l.b16 %v318
    %v331 = vunpack.c.h.b16 %v318
    %v332 = vpack.c.b16 %v330, %v330
    %v333 = vpack.c.b16 %v331, %v331
    %vm334 = vcmask 64512
    %v336 = vsel %vm334, %v322, 0
    %v339 = vsel %vm334, %v327, 0
    %341 = vmatprep.subr.bf16.mxu0 0
    %342 = vmatpush1.bf16.xpose.msra.mxu0 0
    %343 = vmatprep.subr.bf16.mxu0 0
    %344 = vmatpush1.bf16.xpose.msra.mxu0 0
    %345 = vmatprep.subr.bf16.mxu0 0
    %346 = vmatpush1.bf16.xpose.msra.mxu0 0
    %347 = vmatprep.subr.bf16.mxu0 0
    %348 = vmatpush1.bf16.xpose.msra.mxu0 0
    %349 = vmatprep.subr.bf16.mxu0 0
    %350 = vmatpush1.bf16.xpose.msra.mxu0 0
    %351 = vmatprep.subr.bf16.mxu0 0
    %352 = vmatpush1.bf16.xpose.msra.mxu0 0
    %353 = vmatprep.subr.bf16.mxu0 0
    %354 = vmatpush1.bf16.xpose.msra.mxu0 0
    %355 = vmatprep.subr.bf16.mxu0 0
    %356 = vmatpush1.bf16.xpose.msra.mxu0 %v339
    %357 = vmatprep.subr.bf16.mxu0 0
    %358 = vmatpush2.bf16.xpose.msra.mxu0 0
    %359 = vmatprep.subr.bf16.mxu0 0
    %360 = vmatpush2.bf16.xpose.msra.mxu0 0
    %361 = vmatprep.subr.bf16.mxu0 0
    %362 = vmatpush2.bf16.xpose.msra.mxu0 0
    %363 = vmatprep.subr.bf16.mxu0 0
    %364 = vmatpush2.bf16.xpose.msra.mxu0 0
    %365 = vmatprep.subr.bf16.mxu0 0
    %366 = vmatpush2.bf16.xpose.msra.mxu0 0
    %367 = vmatprep.subr.bf16.mxu0 0
    %368 = vmatpush2.bf16.xpose.msra.mxu0 0
    %369 = vmatprep.subr.bf16.mxu0 0
    %370 = vmatpush2.bf16.xpose.msra.mxu0 0
    %371 = vmatprep.subr.bf16.mxu0 0
    %372 = vmatpush2.bf16.xpose.msra.mxu0 0
    %373 = vmatprep.mubr.bf16.mxu0 0
    %374 = vmatmul.mubr.bf16.gmra.mxu0 %v336
    %v375 = vpop.f32.mrf.mxu0
    %v376 = vadd.f32 0.0, %v375
    %v377 = vpop.f32.mrf.mxu0
    %v378 = vpop.f32.mrf.mxu0
    %v379 = vpop.f32.mrf.mxu0
    %380 = vdwg.mxu0
    %v382 = vsel %vm334, %v323, 0
    %v385 = vsel %vm334, %v328, 0
    %387 = vmatprep.subr.bf16.mxu0 0
    %388 = vmatpush1.bf16.xpose.msra.mxu0 0
    %389 = vmatprep.subr.bf16.mxu0 0
    %390 = vmatpush1.bf16.xpose.msra.mxu0 0
    %391 = vmatprep.subr.bf16.mxu0 0
    %392 = vmatpush1.bf16.xpose.msra.mxu0 0
    %393 = vmatprep.subr.bf16.mxu0 0
    %394 = vmatpush1.bf16.xpose.msra.mxu0 0
    %395 = vmatprep.subr.bf16.mxu0 0
    %396 = vmatpush1.bf16.xpose.msra.mxu0 0
    %397 = vmatprep.subr.bf16.mxu0 0
    %398 = vmatpush1.bf16.xpose.msra.mxu0 0
    %399 = vmatprep.subr.bf16.mxu0 0
    %400 = vmatpush1.bf16.xpose.msra.mxu0 0
    %401 = vmatprep.subr.bf16.mxu0 0
    %402 = vmatpush1.bf16.xpose.msra.mxu0 %v385
    %403 = vmatprep.subr.bf16.mxu0 0
    %404 = vmatpush2.bf16.xpose.msra.mxu0 0
    %405 = vmatprep.subr.bf16.mxu0 0
    %406 = vmatpush2.bf16.xpose.msra.mxu0 0
    %407 = vmatprep.subr.bf16.mxu0 0
    %408 = vmatpush2.bf16.xpose.msra.mxu0 0
    %409 = vmatprep.subr.bf16.mxu0 0
    %410 = vmatpush2.bf16.xpose.msra.mxu0 0
    %411 = vmatprep.subr.bf16.mxu0 0
    %412 = vmatpush2.bf16.xpose.msra.mxu0 0
    %413 = vmatprep.subr.bf16.mxu0 0
    %414 = vmatpush2.bf16.xpose.msra.mxu0 0
    %415 = vmatprep.subr.bf16.mxu0 0
    %416 = vmatpush2.bf16.xpose.msra.mxu0 0
    %417 = vmatprep.subr.bf16.mxu0 0
    %418 = vmatpush2.bf16.xpose.msra.mxu0 0
    %419 = vmatprep.mubr.bf16.mxu0 0
    %420 = vmatmul.mubr.bf16.gmra.mxu0 %v382
    %v421 = vpop.f32.mrf.mxu0
    %v422 = vadd.f32 0.0, %v421
    %v423 = vpop.f32.mrf.mxu0
    %v424 = vpop.f32.mrf.mxu0
    %v425 = vpop.f32.mrf.mxu0
    %426 = vdwg.mxu0
    %v427 = vsel %vm334, %v376, -inf
    %428 = vmax.xlane.f32.xlu0 %v427
    %v429 = vpop.xlane.xlu0 %428
    %v430 = vsel %vm334, %v422, -inf
    %431 = vmax.xlane.f32.xlu0 %v430
    %v432 = vpop.xlane.xlu0 %431
    %v433 = vsub.f32 %v376, %v429
    %v434 = vsub.f32 %v422, %v432
    %v435 = vmul.f32 %v433, 1.442695
    %v436 = vpow.pop %v435
    %v437 = vmul.f32 %v434, 1.442695
    %v438 = vpow.pop %v437
    %v439 = vsel %vm334, %v436, 0.0
    %440 = vadd.xlane.f32.xlu0 %v439
    %v441 = vpop.xlane.xlu0 %440
    %v442 = vsel %vm334, %v438, 0.0
    %443 = vadd.xlane.f32.xlu0 %v442
    %v444 = vpop.xlane.xlu0 %443
    %v445 = vrcp.pop %v441
    %v446 = vrcp.pop %v444
    %v447 = vmul.f32 %v436, %v445
    %v448 = vmul.f32 %v438, %v446
    %v449 = vpack.c.bf16 %v447, %v447
    %v450 = vpack.c.bf16 %v448, %v448
    %v452 = vsel %vm334, %v449, 0
    %vm454 = vcmask 1043456
    %v456 = vsel %vm454, %v332, 0
    %458 = vmatprep.subr.bf16.mxu0 0
    %459 = vmatpush1.bf16.msra.mxu0 0
    %460 = vmatprep.subr.bf16.mxu0 0
    %461 = vmatpush1.bf16.msra.mxu0 0
    %462 = vmatprep.subr.bf16.mxu0 0
    %463 = vmatpush1.bf16.msra.mxu0 0
    %464 = vmatprep.subr.bf16.mxu0 0
    %465 = vmatpush1.bf16.msra.mxu0 0
    %466 = vmatprep.subr.bf16.mxu0 0
    %467 = vmatpush1.bf16.msra.mxu0 0
    %468 = vmatprep.subr.bf16.mxu0 0
    %469 = vmatpush1.bf16.msra.mxu0 0
    %470 = vmatprep.subr.bf16.mxu0 0
    %471 = vmatpush1.bf16.msra.mxu0 0
    %472 = vmatprep.subr.bf16.mxu0 0
    %473 = vmatpush1.bf16.msra.mxu0 %v456
    %474 = vmatprep.subr.bf16.mxu0 0
    %475 = vmatpush2.bf16.msra.mxu0 0
    %476 = vmatprep.subr.bf16.mxu0 0
    %477 = vmatpush2.bf16.msra.mxu0 0
    %478 = vmatprep.subr.bf16.mxu0 0
    %479 = vmatpush2.bf16.msra.mxu0 0
    %480 = vmatprep.subr.bf16.mxu0 0
    %481 = vmatpush2.bf16.msra.mxu0 0
    %482 = vmatprep.subr.bf16.mxu0 0
    %483 = vmatpush2.bf16.msra.mxu0 0
    %484 = vmatprep.subr.bf16.mxu0 0
    %485 = vmatpush2.bf16.msra.mxu0 0
    %486 = vmatprep.subr.bf16.mxu0 0
    %487 = vmatpush2.bf16.msra.mxu0 0
    %488 = vmatprep.subr.bf16.mxu0 0
    %489 = vmatpush2.bf16.msra.mxu0 0
    %490 = vmatprep.mubr.bf16.mxu0 0
    %491 = vmatmul.mubr.bf16.gmra.mxu0 %v452
    %v492 = vpop.f32.mrf.mxu0
    %v493 = vadd.f32 0.0, %v492
    %v494 = vpop.f32.mrf.mxu0
    %v495 = vpop.f32.mrf.mxu0
    %v496 = vpop.f32.mrf.mxu0
    %497 = vdwg.mxu0
    %v499 = vsel %vm334, %v450, 0
    %v502 = vsel %vm454, %v333, 0
    %504 = vmatprep.subr.bf16.mxu0 0
    %505 = vmatpush1.bf16.msra.mxu0 0
    %506 = vmatprep.subr.bf16.mxu0 0
    %507 = vmatpush1.bf16.msra.mxu0 0
    %508 = vmatprep.subr.bf16.mxu0 0
    %509 = vmatpush1.bf16.msra.mxu0 0
    %510 = vmatprep.subr.bf16.mxu0 0
    %511 = vmatpush1.bf16.msra.mxu0 0
    %512 = vmatprep.subr.bf16.mxu0 0
    %513 = vmatpush1.bf16.msra.mxu0 0
    %514 = vmatprep.subr.bf16.mxu0 0
    %515 = vmatpush1.bf16.msra.mxu0 0
    %516 = vmatprep.subr.bf16.mxu0 0
    %517 = vmatpush1.bf16.msra.mxu0 0
    %518 = vmatprep.subr.bf16.mxu0 0
    %519 = vmatpush1.bf16.msra.mxu0 %v502
    %520 = vmatprep.subr.bf16.mxu0 0
    %521 = vmatpush2.bf16.msra.mxu0 0
    %522 = vmatprep.subr.bf16.mxu0 0
    %523 = vmatpush2.bf16.msra.mxu0 0
    %524 = vmatprep.subr.bf16.mxu0 0
    %525 = vmatpush2.bf16.msra.mxu0 0
    %526 = vmatprep.subr.bf16.mxu0 0
    %527 = vmatpush2.bf16.msra.mxu0 0
    %528 = vmatprep.subr.bf16.mxu0 0
    %529 = vmatpush2.bf16.msra.mxu0 0
    %530 = vmatprep.subr.bf16.mxu0 0
    %531 = vmatpush2.bf16.msra.mxu0 0
    %532 = vmatprep.subr.bf16.mxu0 0
    %533 = vmatpush2.bf16.msra.mxu0 0
    %534 = vmatprep.subr.bf16.mxu0 0
    %535 = vmatpush2.bf16.msra.mxu0 0
    %536 = vmatprep.mubr.bf16.mxu0 0
    %537 = vmatmul.mubr.bf16.gmra.mxu0 %v499
    %v538 = vpop.f32.mrf.mxu0
    %v539 = vadd.f32 0.0, %v538
    %v540 = vpop.f32.mrf.mxu0
    %v541 = vpop.f32.mrf.mxu0
    %v542 = vpop.f32.mrf.mxu0
    %543 = vdwg.mxu0
    %v544 = vpack.c.bf16 %v493, %v493
    %v545 = vpack.c.bf16 %v539, %v539
    %546 = vrot.lane.b32.xlu0 %v322, 120
    %v547 = vpop.permute.xlu0 %546
    %548 = vrot.lane.b32.xlu0 %v327, 120
    %v549 = vpop.permute.xlu0 %548
    %v551 = vsel %vm334, %v547, 0
    %v554 = vsel %vm334, %v549, 0
    %556 = vmatprep.subr.bf16.mxu0 0
    %557 = vmatpush1.bf16.xpose.msra.mxu0 0
    %558 = vmatprep.subr.bf16.mxu0 0
    %559 = vmatpush1.bf16.xpose.msra.mxu0 0
    %560 = vmatprep.subr.bf16.mxu0 0
    %561 = vmatpush1.bf16.xpose.msra.mxu0 0
    %562 = vmatprep.subr.bf16.mxu0 0
    %563 = vmatpush1.bf16.xpose.msra.mxu0 0
    %564 = vmatprep.subr.bf16.mxu0 0
    %565 = vmatpush1.bf16.xpose.msra.mxu0 0
    %566 = vmatprep.subr.bf16.mxu0 0
    %567 = vmatpush1.bf16.xpose.msra.mxu0 0
    %568 = vmatprep.subr.bf16.mxu0 0
    %569 = vmatpush1.bf16.xpose.msra.mxu0 0
    %570 = vmatprep.subr.bf16.mxu0 0
    %571 = vmatpush1.bf16.xpose.msra.mxu0 %v554
    %572 = vmatprep.subr.bf16.mxu0 0
    %573 = vmatpush2.bf16.xpose.msra.mxu0 0
    %574 = vmatprep.subr.bf16.mxu0 0
    %575 = vmatpush2.bf16.xpose.msra.mxu0 0
    %576 = vmatprep.subr.bf16.mxu0 0
    %577 = vmatpush2.bf16.xpose.msra.mxu0 0
    %578 = vmatprep.subr.bf16.mxu0 0
    %579 = vmatpush2.bf16.xpose.msra.mxu0 0
    %580 = vmatprep.subr.bf16.mxu0 0
    %581 = vmatpush2.bf16.xpose.msra.mxu0 0
    %582 = vmatprep.subr.bf16.mxu0 0
    %583 = vmatpush2.bf16.xpose.msra.mxu0 0
    %584 = vmatprep.subr.bf16.mxu0 0
    %585 = vmatpush2.bf16.xpose.msra.mxu0 0
    %586 = vmatprep.subr.bf16.mxu0 0
    %587 = vmatpush2.bf16.xpose.msra.mxu0 0
    %588 = vmatprep.mubr.bf16.mxu0 0
    %589 = vmatmul.mubr.bf16.gmra.mxu0 %v551
    %v590 = vpop.f32.mrf.mxu0
    %v591 = vadd.f32 0.0, %v590
    %v592 = vpop.f32.mrf.mxu0
    %v593 = vpop.f32.mrf.mxu0
    %v594 = vpop.f32.mrf.mxu0
    %595 = vdwg.mxu0
    %596 = vrot.lane.b32.xlu0 %v323, 120
    %v597 = vpop.permute.xlu0 %596
    %598 = vrot.lane.b32.xlu0 %v328, 120
    %v599 = vpop.permute.xlu0 %598
    %v601 = vsel %vm334, %v597, 0
    %v604 = vsel %vm334, %v599, 0
    %606 = vmatprep.subr.bf16.mxu0 0
    %607 = vmatpush1.bf16.xpose.msra.mxu0 0
    %608 = vmatprep.subr.bf16.mxu0 0
    %609 = vmatpush1.bf16.xpose.msra.mxu0 0
    %610 = vmatprep.subr.bf16.mxu0 0
    %611 = vmatpush1.bf16.xpose.msra.mxu0 0
    %612 = vmatprep.subr.bf16.mxu0 0
    %613 = vmatpush1.bf16.xpose.msra.mxu0 0
    %614 = vmatprep.subr.bf16.mxu0 0
    %615 = vmatpush1.bf16.xpose.msra.mxu0 0
    %616 = vmatprep.subr.bf16.mxu0 0
    %617 = vmatpush1.bf16.xpose.msra.mxu0 0
    %618 = vmatprep.subr.bf16.mxu0 0
    %619 = vmatpush1.bf16.xpose.msra.mxu0 0
    %620 = vmatprep.subr.bf16.mxu0 0
    %621 = vmatpush1.bf16.xpose.msra.mxu0 %v604
    %622 = vmatprep.subr.bf16.mxu0 0
    %623 = vmatpush2.bf16.xpose.msra.mxu0 0
    %624 = vmatprep.subr.bf16.mxu0 0
    %625 = vmatpush2.bf16.xpose.msra.mxu0 0
    %626 = vmatprep.subr.bf16.mxu0 0
    %627 = vmatpush2.bf16.xpose.msra.mxu0 0
    %628 = vmatprep.subr.bf16.mxu0 0
    %629 = vmatpush2.bf16.xpose.msra.mxu0 0
    %630 = vmatprep.subr.bf16.mxu0 0
    %631 = vmatpush2.bf16.xpose.msra.mxu0 0
    %632 = vmatprep.subr.bf16.mxu0 0
    %633 = vmatpush2.bf16.xpose.msra.mxu0 0
    %634 = vmatprep.subr.bf16.mxu0 0
    %635 = vmatpush2.bf16.xpose.msra.mxu0 0
    %636 = vmatprep.subr.bf16.mxu0 0
    %637 = vmatpush2.bf16.xpose.msra.mxu0 0
    %638 = vmatprep.mubr.bf16.mxu0 0
    %639 = vmatmul.mubr.bf16.gmra.mxu0 %v601
    %v640 = vpop.f32.mrf.mxu0
    %v641 = vadd.f32 0.0, %v640
    %v642 = vpop.f32.mrf.mxu0
    %v643 = vpop.f32.mrf.mxu0
    %v644 = vpop.f32.mrf.mxu0
    %645 = vdwg.mxu0
    %v646 = vsel %vm334, %v591, -inf
    %647 = vmax.xlane.f32.xlu0 %v646
    %v648 = vpop.xlane.xlu0 %647
    %v649 = vsel %vm334, %v641, -inf
    %650 = vmax.xlane.f32.xlu0 %v649
    %v651 = vpop.xlane.xlu0 %650
    %v652 = vsub.f32 %v591, %v648
    %v653 = vsub.f32 %v641, %v651
    %v654 = vmul.f32 %v652, 1.442695
    %v655 = vpow.pop %v654
    %v656 = vmul.f32 %v653, 1.442695
    %v657 = vpow.pop %v656
    %v658 = vsel %vm334, %v655, 0.0
    %659 = vadd.xlane.f32.xlu0 %v658
    %v660 = vpop.xlane.xlu0 %659
    %v661 = vsel %vm334, %v657, 0.0
    %662 = vadd.xlane.f32.xlu0 %v661
    %v663 = vpop.xlane.xlu0 %662
    %v664 = vrcp.pop %v660
    %v665 = vrcp.pop %v663
    %v666 = vmul.f32 %v655, %v664
    %v667 = vmul.f32 %v657, %v665
    %v668 = vpack.c.bf16 %v666, %v666
    %v669 = vpack.c.bf16 %v667, %v667
    %670 = vrot.lane.b32.xlu0 %v332, 120
    %v671 = vpop.permute.xlu0 %670
    %v673 = vsel %vm334, %v668, 0
    %v676 = vsel %vm454, %v671, 0
    %678 = vmatprep.subr.bf16.mxu0 0
    %679 = vmatpush1.bf16.msra.mxu0 0
    %680 = vmatprep.subr.bf16.mxu0 0
    %681 = vmatpush1.bf16.msra.mxu0 0
    %682 = vmatprep.subr.bf16.mxu0 0
    %683 = vmatpush1.bf16.msra.mxu0 0
    %684 = vmatprep.subr.bf16.mxu0 0
    %685 = vmatpush1.bf16.msra.mxu0 0
    %686 = vmatprep.subr.bf16.mxu0 0
    %687 = vmatpush1.bf16.msra.mxu0 0
    %688 = vmatprep.subr.bf16.mxu0 0
    %689 = vmatpush1.bf16.msra.mxu0 0
    %690 = vmatprep.subr.bf16.mxu0 0
    %691 = vmatpush1.bf16.msra.mxu0 0
    %692 = vmatprep.subr.bf16.mxu0 0
    %693 = vmatpush1.bf16.msra.mxu0 %v676
    %694 = vmatprep.subr.bf16.mxu0 0
    %695 = vmatpush2.bf16.msra.mxu0 0
    %696 = vmatprep.subr.bf16.mxu0 0
    %697 = vmatpush2.bf16.msra.mxu0 0
    %698 = vmatprep.subr.bf16.mxu0 0
    %699 = vmatpush2.bf16.msra.mxu0 0
    %700 = vmatprep.subr.bf16.mxu0 0
    %701 = vmatpush2.bf16.msra.mxu0 0
    %702 = vmatprep.subr.bf16.mxu0 0
    %703 = vmatpush2.bf16.msra.mxu0 0
    %704 = vmatprep.subr.bf16.mxu0 0
    %705 = vmatpush2.bf16.msra.mxu0 0
    %706 = vmatprep.subr.bf16.mxu0 0
    %707 = vmatpush2.bf16.msra.mxu0 0
    %708 = vmatprep.subr.bf16.mxu0 0
    %709 = vmatpush2.bf16.msra.mxu0 0
    %710 = vmatprep.mubr.bf16.mxu0 0
    %711 = vmatmul.mubr.bf16.gmra.mxu0 %v673
    %v712 = vpop.f32.mrf.mxu0
    %v713 = vadd.f32 0.0, %v712
    %v714 = vpop.f32.mrf.mxu0
    %v715 = vpop.f32.mrf.mxu0
    %v716 = vpop.f32.mrf.mxu0
    %717 = vdwg.mxu0
    %718 = vrot.lane.b32.xlu0 %v333, 120
    %v719 = vpop.permute.xlu0 %718
    %v721 = vsel %vm334, %v669, 0
    %v724 = vsel %vm454, %v719, 0
    %726 = vmatprep.subr.bf16.mxu0 0
    %727 = vmatpush1.bf16.msra.mxu0 0
    %728 = vmatprep.subr.bf16.mxu0 0
    %729 = vmatpush1.bf16.msra.mxu0 0
    %730 = vmatprep.subr.bf16.mxu0 0
    %731 = vmatpush1.bf16.msra.mxu0 0
    %732 = vmatprep.subr.bf16.mxu0 0
    %733 = vmatpush1.bf16.msra.mxu0 0
    %734 = vmatprep.subr.bf16.mxu0 0
    %735 = vmatpush1.bf16.msra.mxu0 0
    %736 = vmatprep.subr.bf16.mxu0 0
    %737 = vmatpush1.bf16.msra.mxu0 0
    %738 = vmatprep.subr.bf16.mxu0 0
    %739 = vmatpush1.bf16.msra.mxu0 0
    %740 = vmatprep.subr.bf16.mxu0 0
    %741 = vmatpush1.bf16.msra.mxu0 %v724
    %742 = vmatprep.subr.bf16.mxu0 0
    %743 = vmatpush2.bf16.msra.mxu0 0
    %744 = vmatprep.subr.bf16.mxu0 0
    %745 = vmatpush2.bf16.msra.mxu0 0
    %746 = vmatprep.subr.bf16.mxu0 0
    %747 = vmatpush2.bf16.msra.mxu0 0
    %748 = vmatprep.subr.bf16.mxu0 0
    %749 = vmatpush2.bf16.msra.mxu0 0
    %750 = vmatprep.subr.bf16.mxu0 0
    %751 = vmatpush2.bf16.msra.mxu0 0
    %752 = vmatprep.subr.bf16.mxu0 0
    %753 = vmatpush2.bf16.msra.mxu0 0
    %754 = vmatprep.subr.bf16.mxu0 0
    %755 = vmatpush2.bf16.msra.mxu0 0
    %756 = vmatprep.subr.bf16.mxu0 0
    %757 = vmatpush2.bf16.msra.mxu0 0
    %758 = vmatprep.mubr.bf16.mxu0 0
    %759 = vmatmul.mubr.bf16.gmra.mxu0 %v721
    %v760 = vpop.f32.mrf.mxu0
    %v761 = vadd.f32 0.0, %v760
    %v762 = vpop.f32.mrf.mxu0
    %v763 = vpop.f32.mrf.mxu0
    %v764 = vpop.f32.mrf.mxu0
    %765 = vdwg.mxu0
    %v766 = vpack.c.bf16 %v713, %v713
    %v767 = vpack.c.bf16 %v761, %v761
    %768 = vrot.lane.b32.xlu0 %v322, 112
    %v769 = vpop.permute.xlu0 %768
    %770 = vrot.lane.b32.xlu0 %v327, 112
    %v771 = vpop.permute.xlu0 %770
    %v773 = vsel %vm334, %v769, 0
    %v776 = vsel %vm334, %v771, 0
    %778 = vmatprep.subr.bf16.mxu0 0
    %779 = vmatpush1.bf16.xpose.msra.mxu0 0
    %780 = vmatprep.subr.bf16.mxu0 0
    %781 = vmatpush1.bf16.xpose.msra.mxu0 0
    %782 = vmatprep.subr.bf16.mxu0 0
    %783 = vmatpush1.bf16.xpose.msra.mxu0 0
    %784 = vmatprep.subr.bf16.mxu0 0
    %785 = vmatpush1.bf16.xpose.msra.mxu0 0
    %786 = vmatprep.subr.bf16.mxu0 0
    %787 = vmatpush1.bf16.xpose.msra.mxu0 0
    %788 = vmatprep.subr.bf16.mxu0 0
    %789 = vmatpush1.bf16.xpose.msra.mxu0 0
    %790 = vmatprep.subr.bf16.mxu0 0
    %791 = vmatpush1.bf16.xpose.msra.mxu0 0
    %792 = vmatprep.subr.bf16.mxu0 0
    %793 = vmatpush1.bf16.xpose.msra.mxu0 %v776
    %794 = vmatprep.subr.bf16.mxu0 0
    %795 = vmatpush2.bf16.xpose.msra.mxu0 0
    %796 = vmatprep.subr.bf16.mxu0 0
    %797 = vmatpush2.bf16.xpose.msra.mxu0 0
    %798 = vmatprep.subr.bf16.mxu0 0
    %799 = vmatpush2.bf16.xpose.msra.mxu0 0
    %800 = vmatprep.subr.bf16.mxu0 0
    %801 = vmatpush2.bf16.xpose.msra.mxu0 0
    %802 = vmatprep.subr.bf16.mxu0 0
    %803 = vmatpush2.bf16.xpose.msra.mxu0 0
    %804 = vmatprep.subr.bf16.mxu0 0
    %805 = vmatpush2.bf16.xpose.msra.mxu0 0
    %806 = vmatprep.subr.bf16.mxu0 0
    %807 = vmatpush2.bf16.xpose.msra.mxu0 0
    %808 = vmatprep.subr.bf16.mxu0 0
    %809 = vmatpush2.bf16.xpose.msra.mxu0 0
    %810 = vmatprep.mubr.bf16.mxu0 0
    %811 = vmatmul.mubr.bf16.gmra.mxu0 %v773
    %v812 = vpop.f32.mrf.mxu0
    %v813 = vadd.f32 0.0, %v812
    %v814 = vpop.f32.mrf.mxu0
    %v815 = vpop.f32.mrf.mxu0
    %v816 = vpop.f32.mrf.mxu0
    %817 = vdwg.mxu0
    %818 = vrot.lane.b32.xlu0 %v323, 112
    %v819 = vpop.permute.xlu0 %818
    %820 = vrot.lane.b32.xlu0 %v328, 112
    %v821 = vpop.permute.xlu0 %820
    %v823 = vsel %vm334, %v819, 0
    %v826 = vsel %vm334, %v821, 0
    %828 = vmatprep.subr.bf16.mxu0 0
    %829 = vmatpush1.bf16.xpose.msra.mxu0 0
    %830 = vmatprep.subr.bf16.mxu0 0
    %831 = vmatpush1.bf16.xpose.msra.mxu0 0
    %832 = vmatprep.subr.bf16.mxu0 0
    %833 = vmatpush1.bf16.xpose.msra.mxu0 0
    %834 = vmatprep.subr.bf16.mxu0 0
    %835 = vmatpush1.bf16.xpose.msra.mxu0 0
    %836 = vmatprep.subr.bf16.mxu0 0
    %837 = vmatpush1.bf16.xpose.msra.mxu0 0
    %838 = vmatprep.subr.bf16.mxu0 0
    %839 = vmatpush1.bf16.xpose.msra.mxu0 0
    %840 = vmatprep.subr.bf16.mxu0 0
    %841 = vmatpush1.bf16.xpose.msra.mxu0 0
    %842 = vmatprep.subr.bf16.mxu0 0
    %843 = vmatpush1.bf16.xpose.msra.mxu0 %v826
    %844 = vmatprep.subr.bf16.mxu0 0
    %845 = vmatpush2.bf16.xpose.msra.mxu0 0
    %846 = vmatprep.subr.bf16.mxu0 0
    %847 = vmatpush2.bf16.xpose.msra.mxu0 0
    %848 = vmatprep.subr.bf16.mxu0 0
    %849 = vmatpush2.bf16.xpose.msra.mxu0 0
    %850 = vmatprep.subr.bf16.mxu0 0
    %851 = vmatpush2.bf16.xpose.msra.mxu0 0
    %852 = vmatprep.subr.bf16.mxu0 0
    %853 = vmatpush2.bf16.xpose.msra.mxu0 0
    %854 = vmatprep.subr.bf16.mxu0 0
    %855 = vmatpush2.bf16.xpose.msra.mxu0 0
    %856 = vmatprep.subr.bf16.mxu0 0
    %857 = vmatpush2.bf16.xpose.msra.mxu0 0
    %858 = vmatprep.subr.bf16.mxu0 0
    %859 = vmatpush2.bf16.xpose.msra.mxu0 0
    %860 = vmatprep.mubr.bf16.mxu0 0
    %861 = vmatmul.mubr.bf16.gmra.mxu0 %v823
    %v862 = vpop.f32.mrf.mxu0
    %v863 = vadd.f32 0.0, %v862
    %v864 = vpop.f32.mrf.mxu0
    %v865 = vpop.f32.mrf.mxu0
    %v866 = vpop.f32.mrf.mxu0
    %867 = vdwg.mxu0
    %v868 = vsel %vm334, %v813, -inf
    %869 = vmax.xlane.f32.xlu0 %v868
    %v870 = vpop.xlane.xlu0 %869
    %v871 = vsel %vm334, %v863, -inf
    %872 = vmax.xlane.f32.xlu0 %v871
    %v873 = vpop.xlane.xlu0 %872
    %v874 = vsub.f32 %v813, %v870
    %v875 = vsub.f32 %v863, %v873
    %v876 = vmul.f32 %v874, 1.442695
    %v877 = vpow.pop %v876
    %v878 = vmul.f32 %v875, 1.442695
    %v879 = vpow.pop %v878
    %v880 = vsel %vm334, %v877, 0.0
    %881 = vadd.xlane.f32.xlu0 %v880
    %v882 = vpop.xlane.xlu0 %881
    %v883 = vsel %vm334, %v879, 0.0
    %884 = vadd.xlane.f32.xlu0 %v883
    %v885 = vpop.xlane.xlu0 %884
    %v886 = vrcp.pop %v882
    %v887 = vrcp.pop %v885
    %v888 = vmul.f32 %v877, %v886
    %v889 = vmul.f32 %v879, %v887
    %v890 = vpack.c.bf16 %v888, %v888
    %v891 = vpack.c.bf16 %v889, %v889
    %892 = vrot.lane.b32.xlu0 %v332, 112
    %v893 = vpop.permute.xlu0 %892
    %v895 = vsel %vm334, %v890, 0
    %v898 = vsel %vm454, %v893, 0
    %900 = vmatprep.subr.bf16.mxu0 0
    %901 = vmatpush1.bf16.msra.mxu0 0
    %902 = vmatprep.subr.bf16.mxu0 0
    %903 = vmatpush1.bf16.msra.mxu0 0
    %904 = vmatprep.subr.bf16.mxu0 0
    %905 = vmatpush1.bf16.msra.mxu0 0
    %906 = vmatprep.subr.bf16.mxu0 0
    %907 = vmatpush1.bf16.msra.mxu0 0
    %908 = vmatprep.subr.bf16.mxu0 0
    %909 = vmatpush1.bf16.msra.mxu0 0
    %910 = vmatprep.subr.bf16.mxu0 0
    %911 = vmatpush1.bf16.msra.mxu0 0
    %912 = vmatprep.subr.bf16.mxu0 0
    %913 = vmatpush1.bf16.msra.mxu0 0
    %914 = vmatprep.subr.bf16.mxu0 0
    %915 = vmatpush1.bf16.msra.mxu0 %v898
    %916 = vmatprep.subr.bf16.mxu0 0
    %917 = vmatpush2.bf16.msra.mxu0 0
    %918 = vmatprep.subr.bf16.mxu0 0
    %919 = vmatpush2.bf16.msra.mxu0 0
    %920 = vmatprep.subr.bf16.mxu0 0
    %921 = vmatpush2.bf16.msra.mxu0 0
    %922 = vmatprep.subr.bf16.mxu0 0
    %923 = vmatpush2.bf16.msra.mxu0 0
    %924 = vmatprep.subr.bf16.mxu0 0
    %925 = vmatpush2.bf16.msra.mxu0 0
    %926 = vmatprep.subr.bf16.mxu0 0
    %927 = vmatpush2.bf16.msra.mxu0 0
    %928 = vmatprep.subr.bf16.mxu0 0
    %929 = vmatpush2.bf16.msra.mxu0 0
    %930 = vmatprep.subr.bf16.mxu0 0
    %931 = vmatpush2.bf16.msra.mxu0 0
    %932 = vmatprep.mubr.bf16.mxu0 0
    %933 = vmatmul.mubr.bf16.gmra.mxu0 %v895
    %v934 = vpop.f32.mrf.mxu0
    %v935 = vadd.f32 0.0, %v934
    %v936 = vpop.f32.mrf.mxu0
    %v937 = vpop.f32.mrf.mxu0
    %v938 = vpop.f32.mrf.mxu0
    %939 = vdwg.mxu0
    %940 = vrot.lane.b32.xlu0 %v333, 112
    %v941 = vpop.permute.xlu0 %940
    %v943 = vsel %vm334, %v891, 0
    %v946 = vsel %vm454, %v941, 0
    %948 = vmatprep.subr.bf16.mxu0 0
    %949 = vmatpush1.bf16.msra.mxu0 0
    %950 = vmatprep.subr.bf16.mxu0 0
    %951 = vmatpush1.bf16.msra.mxu0 0
    %952 = vmatprep.subr.bf16.mxu0 0
    %953 = vmatpush1.bf16.msra.mxu0 0
    %954 = vmatprep.subr.bf16.mxu0 0
    %955 = vmatpush1.bf16.msra.mxu0 0
    %956 = vmatprep.subr.bf16.mxu0 0
    %957 = vmatpush1.bf16.msra.mxu0 0
    %958 = vmatprep.subr.bf16.mxu0 0
    %959 = vmatpush1.bf16.msra.mxu0 0
    %960 = vmatprep.subr.bf16.mxu0 0
    %961 = vmatpush1.bf16.msra.mxu0 0
    %962 = vmatprep.subr.bf16.mxu0 0
    %963 = vmatpush1.bf16.msra.mxu0 %v946
    %964 = vmatprep.subr.bf16.mxu0 0
    %965 = vmatpush2.bf16.msra.mxu0 0
    %966 = vmatprep.subr.bf16.mxu0 0
    %967 = vmatpush2.bf16.msra.mxu0 0
    %968 = vmatprep.subr.bf16.mxu0 0
    %969 = vmatpush2.bf16.msra.mxu0 0
    %970 = vmatprep.subr.bf16.mxu0 0
    %971 = vmatpush2.bf16.msra.mxu0 0
    %972 = vmatprep.subr.bf16.mxu0 0
    %973 = vmatpush2.bf16.msra.mxu0 0
    %974 = vmatprep.subr.bf16.mxu0 0
    %975 = vmatpush2.bf16.msra.mxu0 0
    %976 = vmatprep.subr.bf16.mxu0 0
    %977 = vmatpush2.bf16.msra.mxu0 0
    %978 = vmatprep.subr.bf16.mxu0 0
    %979 = vmatpush2.bf16.msra.mxu0 0
    %980 = vmatprep.mubr.bf16.mxu0 0
    %981 = vmatmul.mubr.bf16.gmra.mxu0 %v943
    %v982 = vpop.f32.mrf.mxu0
    %v983 = vadd.f32 0.0, %v982
    %v984 = vpop.f32.mrf.mxu0
    %v985 = vpop.f32.mrf.mxu0
    %v986 = vpop.f32.mrf.mxu0
    %987 = vdwg.mxu0
    %v988 = vpack.c.bf16 %v935, %v935
    %v989 = vpack.c.bf16 %v983, %v983
    %990 = vrot.lane.b32.xlu0 %v322, 104
    %v991 = vpop.permute.xlu0 %990
    %992 = vrot.lane.b32.xlu0 %v327, 104
    %v993 = vpop.permute.xlu0 %992
    %v995 = vsel %vm334, %v991, 0
    %v998 = vsel %vm334, %v993, 0
    %1000 = vmatprep.subr.bf16.mxu0 0
    %1001 = vmatpush1.bf16.xpose.msra.mxu0 0
    %1002 = vmatprep.subr.bf16.mxu0 0
    %1003 = vmatpush1.bf16.xpose.msra.mxu0 0
    %1004 = vmatprep.subr.bf16.mxu0 0
    %1005 = vmatpush1.bf16.xpose.msra.mxu0 0
    %1006 = vmatprep.subr.bf16.mxu0 0
    %1007 = vmatpush1.bf16.xpose.msra.mxu0 0
    %1008 = vmatprep.subr.bf16.mxu0 0
    %1009 = vmatpush1.bf16.xpose.msra.mxu0 0
    %1010 = vmatprep.subr.bf16.mxu0 0
    %1011 = vmatpush1.bf16.xpose.msra.mxu0 0
    %1012 = vmatprep.subr.bf16.mxu0 0
    %1013 = vmatpush1.bf16.xpose.msra.mxu0 0
    %1014 = vmatprep.subr.bf16.mxu0 0
    %1015 = vmatpush1.bf16.xpose.msra.mxu0 %v998
    %1016 = vmatprep.subr.bf16.mxu0 0
    %1017 = vmatpush2.bf16.xpose.msra.mxu0 0
    %1018 = vmatprep.subr.bf16.mxu0 0
    %1019 = vmatpush2.bf16.xpose.msra.mxu0 0
    %1020 = vmatprep.subr.bf16.mxu0 0
    %1021 = vmatpush2.bf16.xpose.msra.mxu0 0
    %1022 = vmatprep.subr.bf16.mxu0 0
    %1023 = vmatpush2.bf16.xpose.msra.mxu0 0
    %1024 = vmatprep.subr.bf16.mxu0 0
    %1025 = vmatpush2.bf16.xpose.msra.mxu0 0
    %1026 = vmatprep.subr.bf16.mxu0 0
    %1027 = vmatpush2.bf16.xpose.msra.mxu0 0
    %1028 = vmatprep.subr.bf16.mxu0 0
    %1029 = vmatpush2.bf16.xpose.msra.mxu0 0
    %1030 = vmatprep.subr.bf16.mxu0 0
    %1031 = vmatpush2.bf16.xpose.msra.mxu0 0
    %1032 = vmatprep.mubr.bf16.mxu0 0
    %1033 = vmatmul.mubr.bf16.gmra.mxu0 %v995
    %v1034 = vpop.f32.mrf.mxu0
    %v1035 = vadd.f32 0.0, %v1034
    %v1036 = vpop.f32.mrf.mxu0
    %v1037 = vpop.f32.mrf.mxu0
    %v1038 = vpop.f32.mrf.mxu0
    %1039 = vdwg.mxu0
    %1040 = vrot.lane.b32.xlu0 %v323, 104
    %v1041 = vpop.permute.xlu0 %1040
    %1042 = vrot.lane.b32.xlu0 %v328, 104
    %v1043 = vpop.permute.xlu0 %1042
    %v1045 = vsel %vm334, %v1041, 0
    %v1048 = vsel %vm334, %v1043, 0
    %1050 = vmatprep.subr.bf16.mxu0 0
    %1051 = vmatpush1.bf16.xpose.msra.mxu0 0
    %1052 = vmatprep.subr.bf16.mxu0 0
    %1053 = vmatpush1.bf16.xpose.msra.mxu0 0
    %1054 = vmatprep.subr.bf16.mxu0 0
    %1055 = vmatpush1.bf16.xpose.msra.mxu0 0
    %1056 = vmatprep.subr.bf16.mxu0 0
    %1057 = vmatpush1.bf16.xpose.msra.mxu0 0
    %1058 = vmatprep.subr.bf16.mxu0 0
    %1059 = vmatpush1.bf16.xpose.msra.mxu0 0
    %1060 = vmatprep.subr.bf16.mxu0 0
    %1061 = vmatpush1.bf16.xpose.msra.mxu0 0
    %1062 = vmatprep.subr.bf16.mxu0 0
    %1063 = vmatpush1.bf16.xpose.msra.mxu0 0
    %1064 = vmatprep.subr.bf16.mxu0 0
    %1065 = vmatpush1.bf16.xpose.msra.mxu0 %v1048
    %1066 = vmatprep.subr.bf16.mxu0 0
    %1067 = vmatpush2.bf16.xpose.msra.mxu0 0
    %1068 = vmatprep.subr.bf16.mxu0 0
    %1069 = vmatpush2.bf16.xpose.msra.mxu0 0
    %1070 = vmatprep.subr.bf16.mxu0 0
    %1071 = vmatpush2.bf16.xpose.msra.mxu0 0
    %1072 = vmatprep.subr.bf16.mxu0 0
    %1073 = vmatpush2.bf16.xpose.msra.mxu0 0
    %1074 = vmatprep.subr.bf16.mxu0 0
    %1075 = vmatpush2.bf16.xpose.msra.mxu0 0
    %1076 = vmatprep.subr.bf16.mxu0 0
    %1077 = vmatpush2.bf16.xpose.msra.mxu0 0
    %1078 = vmatprep.subr.bf16.mxu0 0
    %1079 = vmatpush2.bf16.xpose.msra.mxu0 0
    %1080 = vmatprep.subr.bf16.mxu0 0
    %1081 = vmatpush2.bf16.xpose.msra.mxu0 0
    %1082 = vmatprep.mubr.bf16.mxu0 0
    %1083 = vmatmul.mubr.bf16.gmra.mxu0 %v1045
    %v1084 = vpop.f32.mrf.mxu0
    %v1085 = vadd.f32 0.0, %v1084
    %v1086 = vpop.f32.mrf.mxu0
    %v1087 = vpop.f32.mrf.mxu0
    %v1088 = vpop.f32.mrf.mxu0
    %1089 = vdwg.mxu0
    %v1090 = vsel %vm334, %v1035, -inf
    %1091 = vmax.xlane.f32.xlu0 %v1090
    %v1092 = vpop.xlane.xlu0 %1091
    %v1093 = vsel %vm334, %v1085, -inf
    %1094 = vmax.xlane.f32.xlu0 %v1093
    %v1095 = vpop.xlane.xlu0 %1094
    %v1096 = vsub.f32 %v1035, %v1092
    %v1097 = vsub.f32 %v1085, %v1095
    %v1098 = vmul.f32 %v1096, 1.442695
    %v1099 = vpow.pop %v1098
    %v1100 = vmul.f32 %v1097, 1.442695
    %v1101 = vpow.pop %v1100
    %v1102 = vsel %vm334, %v1099, 0.0
    %1103 = vadd.xlane.f32.xlu0 %v1102
    %v1104 = vpop.xlane.xlu0 %1103
    %v1105 = vsel %vm334, %v1101, 0.0
    %1106 = vadd.xlane.f32.xlu0 %v1105
    %v1107 = vpop.xlane.xlu0 %1106
    %v1108 = vrcp.pop %v1104
    %v1109 = vrcp.pop %v1107
    %v1110 = vmul.f32 %v1099, %v1108
    %v1111 = vmul.f32 %v1101, %v1109
    %v1112 = vpack.c.bf16 %v1110, %v1110
    %v1113 = vpack.c.bf16 %v1111, %v1111
    %1114 = vrot.lane.b32.xlu0 %v332, 104
    %v1115 = vpop.permute.xlu0 %1114
    %v1117 = vsel %vm334, %v1112, 0
    %v1120 = vsel %vm454, %v1115, 0
    %1122 = vmatprep.subr.bf16.mxu0 0
    %1123 = vmatpush1.bf16.msra.mxu0 0
    %1124 = vmatprep.subr.bf16.mxu0 0
    %1125 = vmatpush1.bf16.msra.mxu0 0
    %1126 = vmatprep.subr.bf16.mxu0 0
    %1127 = vmatpush1.bf16.msra.mxu0 0
    %1128 = vmatprep.subr.bf16.mxu0 0
    %1129 = vmatpush1.bf16.msra.mxu0 0
    %1130 = vmatprep.subr.bf16.mxu0 0
    %1131 = vmatpush1.bf16.msra.mxu0 0
    %1132 = vmatprep.subr.bf16.mxu0 0
    %1133 = vmatpush1.bf16.msra.mxu0 0
    %1134 = vmatprep.subr.bf16.mxu0 0
    %1135 = vmatpush1.bf16.msra.mxu0 0
    %1136 = vmatprep.subr.bf16.mxu0 0
    %1137 = vmatpush1.bf16.msra.mxu0 %v1120
    %1138 = vmatprep.subr.bf16.mxu0 0
    %1139 = vmatpush2.bf16.msra.mxu0 0
    %1140 = vmatprep.subr.bf16.mxu0 0
    %1141 = vmatpush2.bf16.msra.mxu0 0
    %1142 = vmatprep.subr.bf16.mxu0 0
    %1143 = vmatpush2.bf16.msra.mxu0 0
    %1144 = vmatprep.subr.bf16.mxu0 0
    %1145 = vmatpush2.bf16.msra.mxu0 0
    %1146 = vmatprep.subr.bf16.mxu0 0
    %1147 = vmatpush2.bf16.msra.mxu0 0
    %1148 = vmatprep.subr.bf16.mxu0 0
    %1149 = vmatpush2.bf16.msra.mxu0 0
    %1150 = vmatprep.subr.bf16.mxu0 0
    %1151 = vmatpush2.bf16.msra.mxu0 0
    %1152 = vmatprep.subr.bf16.mxu0 0
    %1153 = vmatpush2.bf16.msra.mxu0 0
    %1154 = vmatprep.mubr.bf16.mxu0 0
    %1155 = vmatmul.mubr.bf16.gmra.mxu0 %v1117
    %v1156 = vpop.f32.mrf.mxu0
    %v1157 = vadd.f32 0.0, %v1156
    %v1158 = vpop.f32.mrf.mxu0
    %v1159 = vpop.f32.mrf.mxu0
    %v1160 = vpop.f32.mrf.mxu0
    %1161 = vdwg.mxu0
    %1162 = vrot.lane.b32.xlu0 %v333, 104
    %v1163 = vpop.permute.xlu0 %1162
    %v1165 = vsel %vm334, %v1113, 0
    %v1168 = vsel %vm454, %v1163, 0
    %1170 = vmatprep.subr.bf16.mxu0 0
    %1171 = vmatpush1.bf16.msra.mxu0 0
    %1172 = vmatprep.subr.bf16.mxu0 0
    %1173 = vmatpush1.bf16.msra.mxu0 0
    %1174 = vmatprep.subr.bf16.mxu0 0
    %1175 = vmatpush1.bf16.msra.mxu0 0
    %1176 = vmatprep.subr.bf16.mxu0 0
    %1177 = vmatpush1.bf16.msra.mxu0 0
    %1178 = vmatprep.subr.bf16.mxu0 0
    %1179 = vmatpush1.bf16.msra.mxu0 0
    %1180 = vmatprep.subr.bf16.mxu0 0
    %1181 = vmatpush1.bf16.msra.mxu0 0
    %1182 = vmatprep.subr.bf16.mxu0 0
    %1183 = vmatpush1.bf16.msra.mxu0 0
    %1184 = vmatprep.subr.bf16.mxu0 0
    %1185 = vmatpush1.bf16.msra.mxu0 %v1168
    %1186 = vmatprep.subr.bf16.mxu0 0
    %1187 = vmatpush2.bf16.msra.mxu0 0
    %1188 = vmatprep.subr.bf16.mxu0 0
    %1189 = vmatpush2.bf16.msra.mxu0 0
    %1190 = vmatprep.subr.bf16.mxu0 0
    %1191 = vmatpush2.bf16.msra.mxu0 0
    %1192 = vmatprep.subr.bf16.mxu0 0
    %1193 = vmatpush2.bf16.msra.mxu0 0
    %1194 = vmatprep.subr.bf16.mxu0 0
    %1195 = vmatpush2.bf16.msra.mxu0 0
    %1196 = vmatprep.subr.bf16.mxu0 0
    %1197 = vmatpush2.bf16.msra.mxu0 0
    %1198 = vmatprep.subr.bf16.mxu0 0
    %1199 = vmatpush2.bf16.msra.mxu0 0
    %1200 = vmatprep.subr.bf16.mxu0 0
    %1201 = vmatpush2.bf16.msra.mxu0 0
    %1202 = vmatprep.mubr.bf16.mxu0 0
    %1203 = vmatmul.mubr.bf16.gmra.mxu0 %v1165
    %v1204 = vpop.f32.mrf.mxu0
    %v1205 = vadd.f32 0.0, %v1204
    %v1206 = vpop.f32.mrf.mxu0
    %v1207 = vpop.f32.mrf.mxu0
    %v1208 = vpop.f32.mrf.mxu0
    %1209 = vdwg.mxu0
    %v1210 = vpack.c.bf16 %v1157, %v1157
    %v1211 = vpack.c.bf16 %v1205, %v1205
    %1214 = vrot.lane.b32.xlu0 %v766, 8
    %v1215 = vpop.permute.xlu0 %1214
    %1216 = vrot.lane.b32.xlu0 %v767, 8
    %v1217 = vpop.permute.xlu0 %1216
    %1220 = vrot.lane.b32.xlu0 %v988, 16
    %v1221 = vpop.permute.xlu0 %1220
    %1222 = vrot.lane.b32.xlu0 %v989, 16
    %v1223 = vpop.permute.xlu0 %1222
    %1226 = vrot.lane.b32.xlu0 %v1210, 24
    %v1227 = vpop.permute.xlu0 %1226
    %1228 = vrot.lane.b32.xlu0 %v1211, 24
    %v1229 = vpop.permute.xlu0 %1228
    %v1232 = vsel %vm334, %v544, %v1215
    %v1235 = vsel %vm334, %v545, %v1217
    %vm1236 = vcmask 130048
    %v1238 = vsel %vm1236, %v1232, %v1221
    %v1240 = vsel %vm1236, %v1235, %v1223
    %vm1241 = vcmask 195584
    %v1243 = vsel %vm1241, %v1238, %v1227
    %v1245 = vsel %vm1241, %v1240, %v1229
    %v1246 = vld [vmem:[%s7] sm:$0xf]
    %v1247 = vld [vmem:[%s7 + $0x4] sm:$0xf]
    %v1248 = vld [vmem:[%s7 + $0x8] sm:$0xf]
    %v1249 = vld [vmem:[%s7 + $0xc] sm:$0xf]
    %v1250 = vld [vmem:[%s8] sm:$0x1]
    %v1252 = vlaneseq
    %v1253 = vshrl.u32 %v1252, 7
    %v1254 = vsub.s32 0, %v1253
    %v1255 = vrot.slane %v1250, %v1254
    %v1259 = vunpack.c.l.b16 %v1243
    %v1260 = vunpack.c.l.b16 %v1245
    %v1261 = vpack.c.b16 %v1260, %v1259
    %v1266 = vunpack.c.l.b16 %v1246
    %v1267 = vunpack.c.l.b16 %v1247
    %v1268 = vunpack.c.l.b16 %v1248
    %v1269 = vunpack.c.l.b16 %v1249
    %v1270 = vpack.c.b16 %v1267, %v1266
    %v1271 = vpack.c.b16 %v1269, %v1268
    %v1275 = vsel %vm76, %v1261, 0
    %1277 = vmatprep.subr.bf16.mxu0 0
    %1278 = vmatpush1.bf16.msra.mxu0 0
    %1279 = vmatprep.subr.bf16.mxu0 0
    %1280 = vmatpush1.bf16.msra.mxu0 0
    %1281 = vmatprep.subr.bf16.mxu0 0
    %1282 = vmatpush1.bf16.msra.mxu0 0
    %1283 = vmatprep.subr.bf16.mxu0 0
    %1284 = vmatpush1.bf16.msra.mxu0 0
    %1285 = vmatprep.subr.bf16.mxu0 0
    %1286 = vmatpush1.bf16.msra.mxu0 0
    %1287 = vmatprep.subr.bf16.mxu0 0
    %1288 = vmatpush1.bf16.msra.mxu0 0
    %1289 = vmatprep.subr.bf16.mxu0 0
    %1290 = vmatpush1.bf16.msra.mxu0 %v1271
    %1291 = vmatprep.subr.bf16.mxu0 0
    %1292 = vmatpush1.bf16.msra.mxu0 %v1270
    %1293 = vmatprep.subr.bf16.mxu0 0
    %1294 = vmatpush2.bf16.msra.mxu0 0
    %1295 = vmatprep.subr.bf16.mxu0 0
    %1296 = vmatpush2.bf16.msra.mxu0 0
    %1297 = vmatprep.subr.bf16.mxu0 0
    %1298 = vmatpush2.bf16.msra.mxu0 0
    %1299 = vmatprep.subr.bf16.mxu0 0
    %1300 = vmatpush2.bf16.msra.mxu0 0
    %1301 = vmatprep.subr.bf16.mxu0 0
    %1302 = vmatpush2.bf16.msra.mxu0 0
    %1303 = vmatprep.subr.bf16.mxu0 0
    %1304 = vmatpush2.bf16.msra.mxu0 0
    %1305 = vmatprep.subr.bf16.mxu0 0
    %1306 = vmatpush2.bf16.msra.mxu0 0
    %1307 = vmatprep.subr.bf16.mxu0 0
    %1308 = vmatpush2.bf16.msra.mxu0 0
    %1309 = vmatprep.mubr.bf16.mxu0 0
    %1310 = vmatmul.mubr.bf16.gmra.mxu0 %v1275
    %v1311 = vpop.f32.mrf.mxu0
    %v1312 = vadd.f32 %v1255, %v1311
    %v1313 = vpop.f32.mrf.mxu0
    %v1314 = vpop.f32.mrf.mxu0
    %v1315 = vadd.f32 %v1255, %v1314
    %v1316 = vpop.f32.mrf.mxu0
    %1317 = vdwg.mxu0
    %v1318 = vadd.f32 %v72, %v1312
    %v1319 = vadd.f32 %v73, %v1315
    %v1320 = vld [vmem:[%s11] sm:$0x1]
    %v1321 = vld [vmem:[%s12] sm:$0x1]
    %v1322 = vsel %vm76, %v1318, 0.0
    %1323 = vadd.xlane.f32.xlu0 %v1322
    %v1324 = vpop.xlane.xlu0 %1323
    %v1325 = vsel %vm76, %v1319, 0.0
    %1326 = vadd.xlane.f32.xlu0 %v1325
    %v1327 = vpop.xlane.xlu0 %1326
    %v1328 = vmul.f32 %v1324, %v83
    %v1329 = vmul.f32 %v1327, %v83
    %v1330 = vsub.f32 %v1318, %v1328
    %v1331 = vsub.f32 %v1319, %v1329
    %v1332 = vmul.f32 %v1330, %v1330
    %v1333 = vmul.f32 %v1331, %v1331
    %v1334 = vsel %vm76, %v1332, 0.0
    %1335 = vadd.xlane.f32.xlu0 %v1334
    %v1336 = vpop.xlane.xlu0 %1335
    %v1337 = vsel %vm76, %v1333, 0.0
    %1338 = vadd.xlane.f32.xlu0 %v1337
    %v1339 = vpop.xlane.xlu0 %1338
    %v1340 = vmul.f32 %v1336, %v83
    %v1341 = vmul.f32 %v1339, %v83
    %v1342 = vadd.f32 %v1340, 1e-05
    %v1343 = vadd.f32 %v1341, 1e-05
    %v1344 = vrsqrt.pop %v1342
    %v1345 = vrsqrt.pop %v1343
    %v1346 = vmul.f32 %v1330, %v1344
    %v1347 = vmul.f32 %v1331, %v1345
    %v1349 = vlaneseq
    %v1350 = vshrl.u32 %v1349, 7
    %v1351 = vsub.s32 0, %v1350
    %v1352 = vrot.slane %v1320, %v1351
    %v1354 = vmul.f32 %v1346, %v1352
    %v1355 = vmul.f32 %v1347, %v1352
    %v1357 = vlaneseq
    %v1358 = vshrl.u32 %v1357, 7
    %v1359 = vsub.s32 0, %v1358
    %v1360 = vrot.slane %v1321, %v1359
    %v1362 = vadd.f32 %v1354, %v1360
    %v1363 = vadd.f32 %v1355, %v1360
    %v1364 = vpack.c.bf16 %v1363, %v1362
    %v1365 = vld [vmem:[#allocation2] sm:$0xf]
    %v1366 = vld [vmem:[#allocation2 + $0x4] sm:$0xf]
    %v1367 = vld [vmem:[#allocation2 + $0x8] sm:$0xf]
    %v1368 = vld [vmem:[#allocation2 + $0xc] sm:$0xf]
    %v1369 = vld [vmem:[%s14] sm:$0x1]
    %v1371 = vlaneseq
    %v1372 = vshrl.u32 %v1371, 7
    %v1373 = vsub.s32 0, %v1372
    %v1374 = vrot.slane %v1369, %v1373
    %v1380 = vunpack.c.l.b16 %v1365
    %v1381 = vunpack.c.l.b16 %v1366
    %v1382 = vunpack.c.l.b16 %v1367
    %v1383 = vunpack.c.l.b16 %v1368
    %v1384 = vpack.c.b16 %v1381, %v1380
    %v1385 = vpack.c.b16 %v1383, %v1382
    %v1389 = vsel %vm76, %v1364, 0
    %1391 = vmatprep.subr.bf16.mxu0 0
    %1392 = vmatpush1.bf16.msra.mxu0 0
    %1393 = vmatprep.subr.bf16.mxu0 0
    %1394 = vmatpush1.bf16.msra.mxu0 0
    %1395 = vmatprep.subr.bf16.mxu0 0
    %1396 = vmatpush1.bf16.msra.mxu0 0
    %1397 = vmatprep.subr.bf16.mxu0 0
    %1398 = vmatpush1.bf16.msra.mxu0 0
    %1399 = vmatprep.subr.bf16.mxu0 0
    %1400 = vmatpush1.bf16.msra.mxu0 0
    %1401 = vmatprep.subr.bf16.mxu0 0
    %1402 = vmatpush1.bf16.msra.mxu0 0
    %1403 = vmatprep.subr.bf16.mxu0 0
    %1404 = vmatpush1.bf16.msra.mxu0 %v1385
    %1405 = vmatprep.subr.bf16.mxu0 0
    %1406 = vmatpush1.bf16.msra.mxu0 %v1384
    %1407 = vmatprep.subr.bf16.mxu0 0
    %1408 = vmatpush2.bf16.msra.mxu0 0
    %1409 = vmatprep.subr.bf16.mxu0 0
    %1410 = vmatpush2.bf16.msra.mxu0 0
    %1411 = vmatprep.subr.bf16.mxu0 0
    %1412 = vmatpush2.bf16.msra.mxu0 0
    %1413 = vmatprep.subr.bf16.mxu0 0
    %1414 = vmatpush2.bf16.msra.mxu0 0
    %1415 = vmatprep.subr.bf16.mxu0 0
    %1416 = vmatpush2.bf16.msra.mxu0 0
    %1417 = vmatprep.subr.bf16.mxu0 0
    %1418 = vmatpush2.bf16.msra.mxu0 0
    %1419 = vmatprep.subr.bf16.mxu0 0
    %1420 = vmatpush2.bf16.msra.mxu0 0
    %1421 = vmatprep.subr.bf16.mxu0 0
    %1422 = vmatpush2.bf16.msra.mxu0 0
    %1423 = vmatprep.mubr.bf16.mxu0 0
    %1424 = vmatmul.mubr.bf16.gmra.mxu0 %v1389
    %v1425 = vpop.f32.mrf.mxu0
    %v1426 = vadd.f32 %v1374, %v1425
    %v1427 = vpop.f32.mrf.mxu0
    %v1428 = vpop.f32.mrf.mxu0
    %v1429 = vadd.f32 %v1374, %v1428
    %v1430 = vpop.f32.mrf.mxu0
    %1431 = vdwg.mxu0
    %v1432 = vmul.f32 %v1426, 1.702
    %v1433 = vmul.f32 %v1429, 1.702
    %v1434 = vxor.u32 %v1432, 2147483648
    %v1435 = vxor.u32 %v1433, 2147483648
    %v1436 = vmul.f32 %v1434, 1.442695
    %v1437 = vpow.pop %v1436
    %v1438 = vmul.f32 %v1435, 1.442695
    %v1439 = vpow.pop %v1438
    %v1440 = vadd.f32 %v1437, 1.0
    %v1441 = vadd.f32 %v1439, 1.0
    %v1442 = vrcp.pop %v1440
    %v1443 = vmul.f32 1.0, %v1442
    %v1444 = vrcp.pop %v1441
    %v1445 = vmul.f32 1.0, %v1444
    %v1446 = vmul.f32 %v1426, %v1443
    %v1447 = vmul.f32 %v1429, %v1445
    %v1448 = vpack.c.bf16 %v1447, %v1446
    %v1449 = vld [vmem:[%s15] sm:$0xf]
    %v1450 = vld [vmem:[%s15 + $0x4] sm:$0xf]
    %v1451 = vld [vmem:[%s15 + $0x8] sm:$0xf]
    %v1452 = vld [vmem:[%s15 + $0xc] sm:$0xf]
    %v1453 = vld [vmem:[%s15 + $0x10] sm:$0xf]
    %v1454 = vld [vmem:[%s15 + $0x14] sm:$0xf]
    %v1455 = vld [vmem:[%s15 + $0x18] sm:$0xf]
    %v1456 = vld [vmem:[%s15 + $0x1c] sm:$0xf]
    %v1457 = vld [vmem:[%s15 + $0x20] sm:$0xf]
    %v1458 = vld [vmem:[%s15 + $0x24] sm:$0xf]
    %v1459 = vld [vmem:[%s15 + $0x28] sm:$0xf]
    %v1460 = vld [vmem:[%s15 + $0x2c] sm:$0xf]
    %v1461 = vld [vmem:[%s15 + $0x30] sm:$0xf]
    %v1462 = vld [vmem:[%s15 + $0x34] sm:$0xf]
    %v1463 = vld [vmem:[%s15 + $0x38] sm:$0xf]
    %v1464 = vld [vmem:[%s15 + $0x3c] sm:$0xf]
    %v1465 = vld [vmem:[%s16] sm:$0x1]
    %v1467 = vlaneseq
    %v1468 = vshrl.u32 %v1467, 7
    %v1469 = vsub.s32 0, %v1468
    %v1470 = vrot.slane %v1465, %v1469
    %v1488 = vunpack.c.l.b16 %v1449
    %v1489 = vunpack.c.l.b16 %v1450
    %v1490 = vunpack.c.l.b16 %v1451
    %v1491 = vunpack.c.l.b16 %v1452
    %v1492 = vunpack.c.l.b16 %v1453
    %v1493 = vunpack.c.l.b16 %v1454
    %v1494 = vunpack.c.l.b16 %v1455
    %v1495 = vunpack.c.l.b16 %v1456
    %v1496 = vunpack.c.l.b16 %v1457
    %v1497 = vunpack.c.l.b16 %v1458
    %v1498 = vunpack.c.l.b16 %v1459
    %v1499 = vunpack.c.l.b16 %v1460
    %v1500 = vunpack.c.l.b16 %v1461
    %v1501 = vunpack.c.l.b16 %v1462
    %v1502 = vunpack.c.l.b16 %v1463
    %v1503 = vunpack.c.l.b16 %v1464
    %v1504 = vpack.c.b16 %v1489, %v1488
    %v1505 = vpack.c.b16 %v1491, %v1490
    %v1506 = vpack.c.b16 %v1493, %v1492
    %v1507 = vpack.c.b16 %v1495, %v1494
    %v1508 = vpack.c.b16 %v1497, %v1496
    %v1509 = vpack.c.b16 %v1499, %v1498
    %v1510 = vpack.c.b16 %v1501, %v1500
    %v1511 = vpack.c.b16 %v1503, %v1502
    %1520 = vmatprep.subr.bf16.mxu0 0
    %1521 = vmatpush1.bf16.msra.mxu0 %v1511
    %1522 = vmatprep.subr.bf16.mxu0 0
    %1523 = vmatpush1.bf16.msra.mxu0 %v1510
    %1524 = vmatprep.subr.bf16.mxu0 0
    %1525 = vmatpush1.bf16.msra.mxu0 %v1509
    %1526 = vmatprep.subr.bf16.mxu0 0
    %1527 = vmatpush1.bf16.msra.mxu0 %v1508
    %1528 = vmatprep.subr.bf16.mxu0 0
    %1529 = vmatpush1.bf16.msra.mxu0 %v1507
    %1530 = vmatprep.subr.bf16.mxu0 0
    %1531 = vmatpush1.bf16.msra.mxu0 %v1506
    %1532 = vmatprep.subr.bf16.mxu0 0
    %1533 = vmatpush1.bf16.msra.mxu0 %v1505
    %1534 = vmatprep.subr.bf16.mxu0 0
    %1535 = vmatpush1.bf16.msra.mxu0 %v1504
    %1536 = vmatprep.subr.bf16.mxu0 0
    %1537 = vmatpush2.bf16.msra.mxu0 0
    %1538 = vmatprep.subr.bf16.mxu0 0
    %1539 = vmatpush2.bf16.msra.mxu0 0
    %1540 = vmatprep.subr.bf16.mxu0 0
    %1541 = vmatpush2.bf16.msra.mxu0 0
    %1542 = vmatprep.subr.bf16.mxu0 0
    %1543 = vmatpush2.bf16.msra.mxu0 0
    %1544 = vmatprep.subr.bf16.mxu0 0
    %1545 = vmatpush2.bf16.msra.mxu0 0
    %1546 = vmatprep.subr.bf16.mxu0 0
    %1547 = vmatpush2.bf16.msra.mxu0 0
    %1548 = vmatprep.subr.bf16.mxu0 0
    %1549 = vmatpush2.bf16.msra.mxu0 0
    %1550 = vmatprep.subr.bf16.mxu0 0
    %1551 = vmatpush2.bf16.msra.mxu0 0
    %1552 = vmatprep.mubr.bf16.mxu0 0
    %1553 = vmatmul.mubr.bf16.gmra.mxu0 %v1448
    %v1554 = vpop.f32.mrf.mxu0
    %v1555 = vadd.f32 %v1470, %v1554
    %v1556 = vpop.f32.mrf.mxu0
    %v1557 = vpop.f32.mrf.mxu0
    %v1558 = vadd.f32 %v1470, %v1557
    %v1559 = vpop.f32.mrf.mxu0
    %1560 = vdwg.mxu0
    %v1561 = vadd.f32 %v1318, %v1555
    %v1562 = vadd.f32 %v1319, %v1558
    %1563 = vst.msk [vmem:[#allocation5] sm:$0xff] %vm76, %v1561
    %1564 = vst.msk [vmem:[#allocation5 + $0x8] sm:$0xff] %vm76, %v1562
    // Predicated region
    $region74: #{tpu_custom_call.1} parent=1 // pred_check
      _
    $region75: #{tpu_custom_call.1} parent=1 // pred_check_branch
      %1566 = sbr.rel (0) target = $region77
    $region76: #{tpu_custom_call.1} parent=1 // pred_region
      %s1568 = ssub.s32 256, 256
      %1569 = vsyncadd [#allocation4], %s1568
      %s1570 = sshll.u32 [#allocation5], 4
      %s1571 = int_to_ptr.vmem [resolvable:$true] %s1570
      %1576 = dma.vmem_to_hbm [thread:$0]  %s1571, 256, %s17, [#allocation4], 128, 128, 8
    $region77: #{tpu_custom_call.1} parent=1 // pred_fallthru
      _
    // Predicated region
    $region78: #{tpu_custom_call.1} parent=1 // pred_check
      _
    $region79: #{tpu_custom_call.1} parent=1 // pred_check_branch
      %1578 = sbr.rel (0) target = $region81
    $region80: #{tpu_custom_call.1} parent=1 // pred_region
      %1579 = dma.done [#allocation4], 256
    $region81: #{tpu_custom_call.1} parent=1 // pred_fallthru
      _
    %1580 = vsyncpa [#allocation3], 1
    %1581 = vsyncpa [#allocation4], 1

</llo_original>
